<compile_context>
chip_gen: v7x
topology: tpu7x:2x2x1
jax: 0.10.0
libtpu: 0.0.40
codegen_flags: <defaults>
</compile_context>

<pallas_src>
import functools

import jax
import jax.numpy as jnp
from jax.experimental import pallas as pl
from jax.experimental.pallas import tpu as pltpu

LANE = 128


def _round_up(x, m):
    return (x + m - 1) // m * m


def _vmem_limit_bytes():
    """Generation-aware scoped-VMEM limit (v5e/v6e: 128 MiB phys, v7x: 64)."""
    try:
        cap = int(pltpu.get_tpu_info().vmem_capacity_bytes)
        return min((cap * 3) // 4, 96 * 1024 * 1024)
    except Exception:
        return 32 * 1024 * 1024   # safe fallback on any chip


VMEM_LIMIT = _vmem_limit_bytes()


# ----------------------------------------------------------------------------
# Pallas kernels
# ----------------------------------------------------------------------------
def _dense_kernel(x_ref, w_ref, b_ref, o_ref, *, activation):
    """Fused bf16 matmul (f32 accumulation) + bias (+ optional ReLU)."""
    acc = jnp.dot(x_ref[...], w_ref[...], preferred_element_type=jnp.float32)
    acc = acc + b_ref[...]                       # (1, Np) broadcast over rows
    if activation == "relu":
        acc = jnp.maximum(acc, 0.0)
    o_ref[...] = acc.astype(o_ref.dtype)         # bf16 for mid layers, f32 final


def pallas_dense(xp, w, b, *, m_valid, activation=None,
                 out_dtype=jnp.float32, tm):
    """y = act(xp @ w + b).

    xp: (Mp, Kp) bf16 patch matrix, already zero-padded to the row tile and a
    128-multiple K.  w: (Kp, Np) bf16; b: (Np,) f32.  Returns (m_valid, Np).
    Gridded over M; weights/bias stay resident across the grid.
    """
    mp, kp = xp.shape
    np_ = w.shape[1]
    out = pl.pallas_call(
        functools.partial(_dense_kernel, activation=activation),
        out_shape=jax.ShapeDtypeStruct((mp, np_), out_dtype),
        grid_spec=pltpu.PrefetchScalarGridSpec(
            num_scalar_prefetch=0,
            grid=(mp // tm,),
            in_specs=[
                pl.BlockSpec((tm, kp), lambda i: (i, 0)),
                pl.BlockSpec((kp, np_), lambda i: (0, 0)),   # resident weights
                pl.BlockSpec((1, np_), lambda i: (0, 0)),
            ],
            out_specs=pl.BlockSpec((tm, np_), lambda i: (i, 0)),
        ),
        compiler_params=pltpu.CompilerParams(
            dimension_semantics=("parallel",),
            vmem_limit_bytes=VMEM_LIMIT,
        ),
    )(xp, w, b.reshape(1, np_))
    return out[:m_valid]


def _dense_entropy_kernel(x_ref, w_ref, b_ref, inv_s_ref, em1_ref, mask_ref,
                          yhat_ref, lik_ref, bits_ref, *, m_valid, tm):
    """Second analysis matmul fused with quantization + factorized logistic
    entropy model + per-tile partial bit sums (no cross-tile serialization)."""
    i = pl.program_id(0)

    y = jnp.dot(x_ref[...], w_ref[...], preferred_element_type=jnp.float32)
    y = y + b_ref[...]

    # eval-mode quantization: round-half-to-even (torch.round semantics)
    y_hat = jnp.round(y)

    # Numerically stable logistic CDF difference, evaluated in the lower tail:
    #   lik = F(y+.5) - F(y-.5) = e^u * (e^{1/s} - 1) / ((1+e^v)(1+e^u))
    # with u = (-|y| - .5)/s < 0, v = u + 1/s.  em1 = expm1(1/s) precomputed.
    inv_s = inv_s_ref[...]                       # (1, Cp) per-channel 1/scale
    em1 = em1_ref[...]                           # (1, Cp) expm1(1/scale)
    u = (-0.5 - jnp.abs(y_hat)) * inv_s
    eb = jnp.exp(u)                              # EUP
    num = eb * em1
    ea = eb + num                                # = e^v
    lik = jnp.maximum(num / ((1.0 + ea) * (1.0 + eb)), 1e-9)

    yhat_ref[...] = y_hat
    lik_ref[...] = lik

    # bit count: channel mask kills padded columns; a single (tm,1) row iota
    # masks the (only possibly padded) tail rows.
    bits_map = -jnp.log2(lik) * mask_ref[...]
    nvalid = m_valid - i * tm
    row_ids = jax.lax.broadcasted_iota(jnp.int32, (tm, 1), 0)
    bits_map = jnp.where(row_ids < nvalid, bits_map, 0.0)
    partial = jnp.sum(bits_map)

    # lane-dense (8,128) partial block: value at [0,0], zeros elsewhere.
    r0 = jax.lax.broadcasted_iota(jnp.int32, (8, LANE), 0) == 0
    c0 = jax.lax.broadcasted_iota(jnp.int32, (8, LANE), 1) == 0
    bits_ref[...] = jnp.where(r0 & c0, partial, 0.0)


def pallas_dense_entropy(xp, w, b, inv_s, em1, chan_mask, *, m_valid, tm):
    """Fused: y = xp @ w + b ; y_hat = round(y) ; factorized likelihoods ;
    per-tile partial code lengths.  Returns (y_hat, lik, total_bits)."""
    mp, kp = xp.shape
    cp = w.shape[1]
    grid_m = mp // tm
    kernel = functools.partial(_dense_entropy_kernel, m_valid=m_valid, tm=tm)

    y_hat, lik, bits = pl.pallas_call(
        kernel,
        out_shape=(
            jax.ShapeDtypeStruct((mp, cp), jnp.float32),        # y_hat
            jax.ShapeDtypeStruct((mp, cp), jnp.float32),        # likelihoods
            jax.ShapeDtypeStruct((grid_m * 8, LANE), jnp.float32),  # partials
        ),
        grid_spec=pltpu.PrefetchScalarGridSpec(
            num_scalar_prefetch=0,
            grid=(grid_m,),
            in_specs=[
                pl.BlockSpec((tm, kp), lambda i: (i, 0)),
                pl.BlockSpec((kp, cp), lambda i: (0, 0)),
                pl.BlockSpec((1, cp), lambda i: (0, 0)),
                pl.BlockSpec((1, cp), lambda i: (0, 0)),
                pl.BlockSpec((1, cp), lambda i: (0, 0)),
                pl.BlockSpec((1, cp), lambda i: (0, 0)),
            ],
            out_specs=(
                pl.BlockSpec((tm, cp), lambda i: (i, 0)),
                pl.BlockSpec((tm, cp), lambda i: (i, 0)),
                pl.BlockSpec((8, LANE), lambda i: (i, 0)),
            ),
        ),
        compiler_params=pltpu.CompilerParams(
            dimension_semantics=("parallel",),    # no cross-tile state any more
            vmem_limit_bytes=VMEM_LIMIT,
        ),
    )(xp, w, b.reshape(1, cp), inv_s.reshape(1, cp), em1.reshape(1, cp),
      chan_mask.reshape(1, cp))
    nbits = jnp.sum(bits)                         # tiny reduction in JAX
    return y_hat[:m_valid], lik[:m_valid], nbits


# ----------------------------------------------------------------------------
# JAX glue: bf16 im2col (pad folded in), conv wrappers, pixel shuffle
# ----------------------------------------------------------------------------
def _im2col_bf16(x, kh, kw, stride, pad, mp, kp):
    """x: (B,H,W,C) -> (mp, kp) bf16 patch matrix, row/col zero-pad folded in."""
    x = x.astype(jnp.bfloat16)
    x = jnp.pad(x, ((0, 0), (pad, pad), (pad, pad), (0, 0)))
    b, hp, wp, c = x.shape
    oh = (hp - kh) // stride + 1
    ow = (wp - kw) // stride + 1
    cols = [x[:, i:i + stride * oh:stride, j:j + stride * ow:stride, :]
            for i in range(kh) for j in range(kw)]
    p = jnp.stack(cols, axis=3).reshape(b * oh * ow, kh * kw * c)
    m, k = p.shape
    return jnp.pad(p, ((0, mp - m), (0, kp - k)))


def _conv_geometry(x, w_pad, kh, kw, stride, pad, tm_default):
    batch, h, w_in, _ = x.shape
    oh = (h + 2 * pad - kh) // stride + 1
    ow = (w_in + 2 * pad - kw) // stride + 1
    m = batch * oh * ow
    tm = min(tm_default, _round_up(m, 8))
    mp = _round_up(m, tm)
    kp = w_pad.shape[0]
    return batch, oh, ow, m, tm, mp, kp


def conv2d(x, w_pad, b_pad, cout, kh, kw, stride, pad, activation=None,
           out_dtype=jnp.float32, tm_default=512):
    batch, oh, ow, m, tm, mp, kp = _conv_geometry(x, w_pad, kh, kw, stride,
                                                  pad, tm_default)
    patches = _im2col_bf16(x, kh, kw, stride, pad, mp, kp)
    y = pallas_dense(patches, w_pad, b_pad, m_valid=m, activation=activation,
                     out_dtype=out_dtype, tm=tm)
    return y[:, :cout].reshape(batch, oh, ow, cout)


def conv2d_entropy(x, w_pad, b_pad, inv_s_pad, em1_pad, mask_pad, cout,
                   kh, kw, stride, pad, tm_default=512):
    batch, oh, ow, m, tm, mp, kp = _conv_geometry(x, w_pad, kh, kw, stride,
                                                  pad, tm_default)
    patches = _im2col_bf16(x, kh, kw, stride, pad, mp, kp)
    y_hat2d, lik2d, nbits = pallas_dense_entropy(
        patches, w_pad, b_pad, inv_s_pad, em1_pad, mask_pad, m_valid=m, tm=tm)
    y_hat = y_hat2d[:, :cout].reshape(batch, oh, ow, cout)
    lik = lik2d[:, :cout].reshape(batch, oh, ow, cout)
    return y_hat, lik, nbits


def depth_to_space(x, r):
    """NHWC pixel shuffle with torch.nn.PixelShuffle channel order (C,r,r)."""
    b, h, w, c = x.shape
    co = c // (r * r)
    x = x.reshape(b, h, w, co, r, r)
    x = x.transpose(0, 1, 4, 2, 5, 3)             # b, h, r, w, r, co
    return x.reshape(b, h * r, w * r, co)


# ----------------------------------------------------------------------------
# Codec model (synthetic weights, deterministic init, pre-padded for the MXU)
# ----------------------------------------------------------------------------
def _make_conv_weights(key, kh, kw, cin, cout):
    fan_in = kh * kw * cin
    w = jax.random.normal(key, (kh, kw, cin, cout), jnp.float32) / jnp.sqrt(float(fan_in))
    kp = _round_up(fan_in, LANE)
    np_ = _round_up(cout, LANE)
    w2 = w.reshape(fan_in, cout)
    w2 = jnp.pad(w2, ((0, kp - fan_in), (0, np_ - cout))).astype(jnp.bfloat16)
    b = jnp.zeros((np_,), jnp.float32)
    return w2, b


class CodecModelPallas:
    def __init__(self, key, n_ch=32, m_ch=48):
        k1, k2, k3, k4, k5 = jax.random.split(key, 5)
        self.n_ch, self.m_ch = n_ch, m_ch

        # analysis transform g_a : 3 -> N (s2) -> M (s2)
        self.ga1_w, self.ga1_b = _make_conv_weights(k1, 5, 5, 3, n_ch)
        self.ga2_w, self.ga2_b = _make_conv_weights(k2, 5, 5, n_ch, m_ch)

        # per-channel entropy-model scales (reciprocal + expm1 precomputed;
        # padded channels masked in-kernel via chan_mask)
        cp = _round_up(m_ch, LANE)
        scales = 0.5 + jnp.abs(jax.random.normal(k3, (m_ch,), jnp.float32))
        inv_s = 1.0 / scales
        self.inv_scales = jnp.concatenate(
            [inv_s, jnp.ones((cp - m_ch,), jnp.float32)])
        self.em1 = jnp.expm1(self.inv_scales)
        self.chan_mask = jnp.concatenate(
            [jnp.ones((m_ch,), jnp.float32), jnp.zeros((cp - m_ch,), jnp.float32)])

        # synthesis transform g_s : M -> N (x2 up) -> 3 (x2 up) via pixel shuffle
        self.gs1_w, self.gs1_b = _make_conv_weights(k4, 3, 3, m_ch, n_ch * 4)
        self.gs2_w, self.gs2_b = _make_conv_weights(k5, 3, 3, n_ch, 3 * 4)

    def __call__(self, image_nchw, return_bpp=False):
        x = jnp.transpose(image_nchw, (0, 2, 3, 1)).astype(jnp.float32)  # NHWC
        b, h, w, _ = x.shape

        # analysis (ga1 emits bf16: its only consumer is the next bf16 matmul)
        h1 = conv2d(x, self.ga1_w, self.ga1_b, self.n_ch,
                    kh=5, kw=5, stride=2, pad=2, activation="relu",
                    out_dtype=jnp.bfloat16)
        # second analysis conv fused with quantization + entropy model
        y_hat, lik, nbits = conv2d_entropy(
            h1, self.ga2_w, self.ga2_b, self.inv_scales, self.em1,
            self.chan_mask, self.m_ch, kh=5, kw=5, stride=2, pad=2)

        # synthesis (gs1 emits bf16; final layer stays f32)
        u1 = conv2d(y_hat, self.gs1_w, self.gs1_b, self.n_ch * 4,
                    kh=3, kw=3, stride=1, pad=1, activation="relu",
                    out_dtype=jnp.bfloat16)
        u1 = depth_to_space(u1, 2)
        u2 = conv2d(u1, self.gs2_w, self.gs2_b, 3 * 4,
                    kh=3, kw=3, stride=1, pad=1, activation=None,
                    out_dtype=jnp.float32)
        x_hat = depth_to_space(u2, 2)                                    # (B,H,W,3)

        # match PyTorch output conventions (NCHW)
        x_hat_nchw = jnp.transpose(x_hat, (0, 3, 1, 2))
        lik_y_nchw = jnp.transpose(lik, (0, 3, 1, 2))

        # NOTE: the reference module divides by H*W only (not B*H*W):
        #   num_pixels = image.shape[-1] * image.shape[-2]
        num_pixels = h * w
        bpp = nbits / jnp.float32(num_pixels)     # sum(-log2 p_y) / (H*W)

        return {"x_hat": x_hat_nchw, "likelihoods": {"y": lik_y_nchw}, "bpp": bpp}


# ----------------------------------------------------------------------------
if __name__ == "__main__":
    key_in = jax.random.PRNGKey(0)
    image = jax.random.uniform(key_in, (2, 3, 16, 16), jnp.float32)  # NCHW image

    model = CodecModelPallas(jax.random.PRNGKey(1))
    fwd = jax.jit(model.__call__)        # fuse the im2col / layout glue
    out = fwd(image)

    jax.block_until_ready(out["x_hat"])
    jax.block_until_ready(out["likelihoods"]["y"])
    jax.block_until_ready(out["bpp"])

    assert out["x_hat"].shape == (2, 3, 16, 16)
    assert out["likelihoods"]["y"].shape == (2, 48, 4, 4)
    assert out["bpp"].shape == ()
    assert bool(jnp.isfinite(out["bpp"]))
    print("KERNEL_OK")
</pallas_src>

<mosaic_0001>
module attributes {stable_mosaic.version = 11 : i64} {
  func.func @_dense_kernel(%arg0: i32, %arg1: memref<128x128xbf16, #tpu.memory_space<vmem>>, %arg2: memref<128x128xbf16, #tpu.memory_space<vmem>>, %arg3: memref<1x128xf32, #tpu.memory_space<vmem>>, %arg4: memref<128x128xbf16, #tpu.memory_space<vmem>>) attributes {dimension_semantics = [#tpu.dimension_semantics<parallel>], iteration_bounds = array<i64: 1>, scalar_prefetch = 0 : i64, scratch_operands = 0 : i64, tpu.core_type = #tpu.core_type<tc>, window_params = [{transform_indices = @transform_0, window_bounds = array<i64: 128, 128>}, {pipeline_mode = #tpu.pipeline_mode<synchronous>, transform_indices = @transform_1, window_bounds = array<i64: 128, 128>}, {pipeline_mode = #tpu.pipeline_mode<synchronous>, transform_indices = @transform_2, window_bounds = array<i64: 1, 128>}, {transform_indices = @transform_3, window_bounds = array<i64: 128, 128>}]} {
    %c0 = arith.constant 0 : index
    %c0_0 = arith.constant 0 : index
    %0 = vector.load %arg1[%c0, %c0_0] : memref<128x128xbf16, #tpu.memory_space<vmem>>, vector<128x128xbf16>
    %c0_1 = arith.constant 0 : index
    %c0_2 = arith.constant 0 : index
    %1 = vector.load %arg2[%c0_1, %c0_2] : memref<128x128xbf16, #tpu.memory_space<vmem>>, vector<128x128xbf16>
    %cst = arith.constant dense<0.000000e+00> : vector<128x128xf32>
    %2 = tpu.matmul %0, %1, %cst {dimension_numbers = #tpu.dot_dimension_numbers<[1], [0], [0], [1], [0, 0, 1, 1], [], []>} : vector<128x128xbf16>, vector<128x128xbf16>, vector<128x128xf32> -> vector<128x128xf32>
    %c0_3 = arith.constant 0 : index
    %c0_4 = arith.constant 0 : index
    %3 = vector.load %arg3[%c0_3, %c0_4] : memref<1x128xf32, #tpu.memory_space<vmem>>, vector<1x128xf32>
    %4 = vector.broadcast %3 : vector<1x128xf32> to vector<128x128xf32>
    %5 = arith.addf %2, %4 : vector<128x128xf32>
    %cst_5 = arith.constant 0.000000e+00 : f32
    %6 = vector.broadcast %cst_5 : f32 to vector<128x128xf32>
    %7 = arith.maximumf %5, %6 : vector<128x128xf32>
    %8 = arith.truncf %7 : vector<128x128xf32> to vector<128x128xbf16>
    %c0_6 = arith.constant 0 : index
    %c0_7 = arith.constant 0 : index
    %9 = vector.load %arg4[%c0_6, %c0_7] : memref<128x128xbf16, #tpu.memory_space<vmem>>, vector<128x128xbf16>
    tpu.vector_store %arg4[%c0_6, %c0_7], %8 {strides = array<i32>} : memref<128x128xbf16, #tpu.memory_space<vmem>>, vector<128x128xbf16>,
    return
  }
  func.func @transform_0(%arg0: i32) -> (i32, i32) {
    %c0_i32 = arith.constant 0 : i32
    %c0_i32_0 = arith.constant 0 : i32
    return %arg0, %c0_i32 : i32, i32
  }
  func.func @transform_1(%arg0: i32) -> (i32, i32) {
    %c0_i32 = arith.constant 0 : i32
    %c0_i32_0 = arith.constant 0 : i32
    %c0_i32_1 = arith.constant 0 : i32
    return %c0_i32, %c0_i32_0 : i32, i32
  }
  func.func @transform_2(%arg0: i32) -> (i32, i32) {
    %c0_i32 = arith.constant 0 : i32
    %c0_i32_0 = arith.constant 0 : i32
    %c0_i32_1 = arith.constant 0 : i32
    return %c0_i32, %c0_i32_0 : i32, i32
  }
  func.func @transform_3(%arg0: i32) -> (i32, i32) {
    %c0_i32 = arith.constant 0 : i32
    %c0_i32_0 = arith.constant 0 : i32
    return %arg0, %c0_i32 : i32, i32
  }
}

module attributes {stable_mosaic.version = 11 : i64} {
  func.func @_dense_entropy_kernel(%arg0: i32, %arg1: memref<32x896xbf16, #tpu.memory_space<vmem>>, %arg2: memref<896x128xbf16, #tpu.memory_space<vmem>>, %arg3: memref<1x128xf32, #tpu.memory_space<vmem>>, %arg4: memref<1x128xf32, #tpu.memory_space<vmem>>, %arg5: memref<1x128xf32, #tpu.memory_space<vmem>>, %arg6: memref<1x128xf32, #tpu.memory_space<vmem>>, %arg7: memref<32x128xf32, #tpu.memory_space<vmem>>, %arg8: memref<32x128xf32, #tpu.memory_space<vmem>>, %arg9: memref<8x128xf32, #tpu.memory_space<vmem>>) attributes {dimension_semantics = [#tpu.dimension_semantics<parallel>], iteration_bounds = array<i64: 1>, scalar_prefetch = 0 : i64, scratch_operands = 0 : i64, tpu.core_type = #tpu.core_type<tc>, window_params = [{transform_indices = @transform_0, window_bounds = array<i64: 32, 896>}, {pipeline_mode = #tpu.pipeline_mode<synchronous>, transform_indices = @transform_1, window_bounds = array<i64: 896, 128>}, {pipeline_mode = #tpu.pipeline_mode<synchronous>, transform_indices = @transform_2, window_bounds = array<i64: 1, 128>}, {pipeline_mode = #tpu.pipeline_mode<synchronous>, transform_indices = @transform_3, window_bounds = array<i64: 1, 128>}, {pipeline_mode = #tpu.pipeline_mode<synchronous>, transform_indices = @transform_4, window_bounds = array<i64: 1, 128>}, {pipeline_mode = #tpu.pipeline_mode<synchronous>, transform_indices = @transform_5, window_bounds = array<i64: 1, 128>}, {transform_indices = @transform_6, window_bounds = array<i64: 32, 128>}, {transform_indices = @transform_7, window_bounds = array<i64: 32, 128>}, {transform_indices = @transform_8, window_bounds = array<i64: 8, 128>}]} {
    %c0 = arith.constant 0 : index
    %c0_0 = arith.constant 0 : index
    %0 = vector.load %arg1[%c0, %c0_0] : memref<32x896xbf16, #tpu.memory_space<vmem>>, vector<32x896xbf16>
    %c0_1 = arith.constant 0 : index
    %c0_2 = arith.constant 0 : index
    %1 = vector.load %arg2[%c0_1, %c0_2] : memref<896x128xbf16, #tpu.memory_space<vmem>>, vector<896x128xbf16>
    %cst = arith.constant dense<0.000000e+00> : vector<32x128xf32>
    %2 = tpu.matmul %0, %1, %cst {dimension_numbers = #tpu.dot_dimension_numbers<[1], [0], [0], [1], [0, 0, 1, 1], [], []>} : vector<32x896xbf16>, vector<896x128xbf16>, vector<32x128xf32> -> vector<32x128xf32>
    %c0_3 = arith.constant 0 : index
    %c0_4 = arith.constant 0 : index
    %3 = vector.load %arg3[%c0_3, %c0_4] : memref<1x128xf32, #tpu.memory_space<vmem>>, vector<1x128xf32>
    %4 = vector.broadcast %3 : vector<1x128xf32> to vector<32x128xf32>
    %5 = arith.addf %2, %4 : vector<32x128xf32>
    %6 = math.roundeven %5 : vector<32x128xf32>
    %c0_5 = arith.constant 0 : index
    %c0_6 = arith.constant 0 : index
    %7 = vector.load %arg4[%c0_5, %c0_6] : memref<1x128xf32, #tpu.memory_space<vmem>>, vector<1x128xf32>
    %c0_7 = arith.constant 0 : index
    %c0_8 = arith.constant 0 : index
    %8 = vector.load %arg5[%c0_7, %c0_8] : memref<1x128xf32, #tpu.memory_space<vmem>>, vector<1x128xf32>
    %9 = math.absf %6 : vector<32x128xf32>
    %cst_9 = arith.constant -5.000000e-01 : f32
    %10 = vector.broadcast %cst_9 : f32 to vector<32x128xf32>
    %11 = arith.subf %10, %9 : vector<32x128xf32>
    %12 = vector.broadcast %7 : vector<1x128xf32> to vector<32x128xf32>
    %13 = arith.mulf %11, %12 : vector<32x128xf32>
    %14 = math.exp %13 : vector<32x128xf32>
    %15 = vector.broadcast %8 : vector<1x128xf32> to vector<32x128xf32>
    %16 = arith.mulf %14, %15 : vector<32x128xf32>
    %17 = arith.addf %14, %16 : vector<32x128xf32>
    %cst_10 = arith.constant 1.000000e+00 : f32
    %18 = vector.broadcast %cst_10 : f32 to vector<32x128xf32>
    %19 = arith.addf %18, %17 : vector<32x128xf32>
    %cst_11 = arith.constant 1.000000e+00 : f32
    %20 = vector.broadcast %cst_11 : f32 to vector<32x128xf32>
    %21 = arith.addf %20, %14 : vector<32x128xf32>
    %22 = arith.mulf %19, %21 : vector<32x128xf32>
    %23 = arith.divf %16, %22 : vector<32x128xf32>
    %cst_12 = arith.constant 9.99999971E-10 : f32
    %24 = vector.broadcast %cst_12 : f32 to vector<32x128xf32>
    %25 = arith.maximumf %23, %24 : vector<32x128xf32>
    %c0_13 = arith.constant 0 : index
    %c0_14 = arith.constant 0 : index
    %26 = vector.load %arg7[%c0_13, %c0_14] : memref<32x128xf32, #tpu.memory_space<vmem>>, vector<32x128xf32>
    tpu.vector_store %arg7[%c0_13, %c0_14], %6 {strides = array<i32>} : memref<32x128xf32, #tpu.memory_space<vmem>>, vector<32x128xf32>,
    %c0_15 = arith.constant 0 : index
    %c0_16 = arith.constant 0 : index
    %27 = vector.load %arg8[%c0_15, %c0_16] : memref<32x128xf32, #tpu.memory_space<vmem>>, vector<32x128xf32>
    tpu.vector_store %arg8[%c0_15, %c0_16], %25 {strides = array<i32>} : memref<32x128xf32, #tpu.memory_space<vmem>>, vector<32x128xf32>,
    %28 = math.log %25 : vector<32x128xf32>
    %cst_17 = arith.constant 2.000000e+00 : f32
    %29 = math.log %cst_17 : f32
    %30 = vector.broadcast %29 : f32 to vector<32x128xf32>
    %31 = arith.divf %28, %30 : vector<32x128xf32>
    %cst_18 = arith.constant 0.000000e+00 : f32
    %32 = vector.broadcast %cst_18 : f32 to vector<32x128xf32>
    %33 = arith.subf %32, %31 : vector<32x128xf32>
    %c0_19 = arith.constant 0 : index
    %c0_20 = arith.constant 0 : index
    %34 = vector.load %arg6[%c0_19, %c0_20] : memref<1x128xf32, #tpu.memory_space<vmem>>, vector<1x128xf32>
    %35 = vector.broadcast %34 : vector<1x128xf32> to vector<32x128xf32>
    %36 = arith.mulf %33, %35 : vector<32x128xf32>
    %c32_i32 = arith.constant 32 : i32
    %37 = arith.muli %arg0, %c32_i32 : i32
    %c32_i32_21 = arith.constant 32 : i32
    %38 = arith.subi %c32_i32_21, %37 : i32
    %39 = tpu.iota {dimensions = array<i32: 0>} : vector<32x1xi32>
    %40 = vector.broadcast %38 : i32 to vector<32x1xi32>
    %41 = arith.cmpi slt, %39, %40 : vector<32x1xi32>
    %cst_22 = arith.constant 0.000000e+00 : f32
    %42 = vector.shape_cast %41 : vector<32x1xi1> to vector<32x1xi1>
    %43 = vector.broadcast %42 : vector<32x1xi1> to vector<32x128xi1>
    %44 = vector.broadcast %cst_22 : f32 to vector<32x128xf32>
    %45 = arith.select %43, %36, %44 : vector<32x128xi1>, vector<32x128xf32>
    %46 = vector.shape_cast %45 : vector<32x128xf32> to vector<1x32x128xf32>
    %cst_23 = arith.constant dense<0.000000e+00> : vector<1xf32>
    %47 = vector.multi_reduction <add>, %46, %cst_23 [1, 2] : vector<1x32x128xf32> to vector<1xf32>
    %48 = vector.shape_cast %47 : vector<1xf32> to vector<1x1x1xf32>
    %49 = vector.extract %48[0, 0, 0] : f32 from vector<1x1x1xf32>
    %50 = tpu.iota {dimensions = array<i32: 0>} : vector<8x128xi32>
    %c0_i32 = arith.constant 0 : i32
    %51 = vector.broadcast %c0_i32 : i32 to vector<8x128xi32>
    %52 = arith.cmpi eq, %50, %51 : vector<8x128xi32>
    %53 = tpu.iota {dimensions = array<i32: 1>} : vector<8x128xi32>
    %c0_i32_24 = arith.constant 0 : i32
    %54 = vector.broadcast %c0_i32_24 : i32 to vector<8x128xi32>
    %55 = arith.cmpi eq, %53, %54 : vector<8x128xi32>
    %56 = arith.andi %52, %55 : vector<8x128xi1>
    %cst_25 = arith.constant 0.000000e+00 : f32
    %57 = vector.broadcast %49 : f32 to vector<8x128xf32>
    %58 = vector.broadcast %cst_25 : f32 to vector<8x128xf32>
    %59 = arith.select %56, %57, %58 : vector<8x128xi1>, vector<8x128xf32>
    %c0_26 = arith.constant 0 : index
    %c0_27 = arith.constant 0 : index
    %60 = vector.load %arg9[%c0_26, %c0_27] : memref<8x128xf32, #tpu.memory_space<vmem>>, vector<8x128xf32>
    tpu.vector_store %arg9[%c0_26, %c0_27], %59 {strides = array<i32>} : memref<8x128xf32, #tpu.memory_space<vmem>>, vector<8x128xf32>,
    return
  }
  func.func @transform_0(%arg0: i32) -> (i32, i32) {
    %c0_i32 = arith.constant 0 : i32
    %c0_i32_0 = arith.constant 0 : i32
    return %arg0, %c0_i32 : i32, i32
  }
  func.func @transform_1(%arg0: i32) -> (i32, i32) {
    %c0_i32 = arith.constant 0 : i32
    %c0_i32_0 = arith.constant 0 : i32
    %c0_i32_1 = arith.constant 0 : i32
    return %c0_i32, %c0_i32_0 : i32, i32
  }
  func.func @transform_2(%arg0: i32) -> (i32, i32) {
    %c0_i32 = arith.constant 0 : i32
    %c0_i32_0 = arith.constant 0 : i32
    %c0_i32_1 = arith.constant 0 : i32
    return %c0_i32, %c0_i32_0 : i32, i32
  }
  func.func @transform_3(%arg0: i32) -> (i32, i32) {
    %c0_i32 = arith.constant 0 : i32
    %c0_i32_0 = arith.constant 0 : i32
    %c0_i32_1 = arith.constant 0 : i32
    return %c0_i32, %c0_i32_0 : i32, i32
  }
  func.func @transform_4(%arg0: i32) -> (i32, i32) {
    %c0_i32 = arith.constant 0 : i32
    %c0_i32_0 = arith.constant 0 : i32
    %c0_i32_1 = arith.constant 0 : i32
    return %c0_i32, %c0_i32_0 : i32, i32
  }
  func.func @transform_5(%arg0: i32) -> (i32, i32) {
    %c0_i32 = arith.constant 0 : i32
    %c0_i32_0 = arith.constant 0 : i32
    %c0_i32_1 = arith.constant 0 : i32
    return %c0_i32, %c0_i32_0 : i32, i32
  }
  func.func @transform_6(%arg0: i32) -> (i32, i32) {
    %c0_i32 = arith.constant 0 : i32
    %c0_i32_0 = arith.constant 0 : i32
    return %arg0, %c0_i32 : i32, i32
  }
  func.func @transform_7(%arg0: i32) -> (i32, i32) {
    %c0_i32 = arith.constant 0 : i32
    %c0_i32_0 = arith.constant 0 : i32
    return %arg0, %c0_i32 : i32, i32
  }
  func.func @transform_8(%arg0: i32) -> (i32, i32) {
    %c0_i32 = arith.constant 0 : i32
    %c0_i32_0 = arith.constant 0 : i32
    return %arg0, %c0_i32 : i32, i32
  }
}

module attributes {stable_mosaic.version = 11 : i64} {
  func.func @_dense_kernel(%arg0: i32, %arg1: memref<32x512xbf16, #tpu.memory_space<vmem>>, %arg2: memref<512x128xbf16, #tpu.memory_space<vmem>>, %arg3: memref<1x128xf32, #tpu.memory_space<vmem>>, %arg4: memref<32x128xbf16, #tpu.memory_space<vmem>>) attributes {dimension_semantics = [#tpu.dimension_semantics<parallel>], iteration_bounds = array<i64: 1>, scalar_prefetch = 0 : i64, scratch_operands = 0 : i64, tpu.core_type = #tpu.core_type<tc>, window_params = [{transform_indices = @transform_0, window_bounds = array<i64: 32, 512>}, {pipeline_mode = #tpu.pipeline_mode<synchronous>, transform_indices = @transform_1, window_bounds = array<i64: 512, 128>}, {pipeline_mode = #tpu.pipeline_mode<synchronous>, transform_indices = @transform_2, window_bounds = array<i64: 1, 128>}, {transform_indices = @transform_3, window_bounds = array<i64: 32, 128>}]} {
    %c0 = arith.constant 0 : index
    %c0_0 = arith.constant 0 : index
    %0 = vector.load %arg1[%c0, %c0_0] : memref<32x512xbf16, #tpu.memory_space<vmem>>, vector<32x512xbf16>
    %c0_1 = arith.constant 0 : index
    %c0_2 = arith.constant 0 : index
    %1 = vector.load %arg2[%c0_1, %c0_2] : memref<512x128xbf16, #tpu.memory_space<vmem>>, vector<512x128xbf16>
    %cst = arith.constant dense<0.000000e+00> : vector<32x128xf32>
    %2 = tpu.matmul %0, %1, %cst {dimension_numbers = #tpu.dot_dimension_numbers<[1], [0], [0], [1], [0, 0, 1, 1], [], []>} : vector<32x512xbf16>, vector<512x128xbf16>, vector<32x128xf32> -> vector<32x128xf32>
    %c0_3 = arith.constant 0 : index
    %c0_4 = arith.constant 0 : index
    %3 = vector.load %arg3[%c0_3, %c0_4] : memref<1x128xf32, #tpu.memory_space<vmem>>, vector<1x128xf32>
    %4 = vector.broadcast %3 : vector<1x128xf32> to vector<32x128xf32>
    %5 = arith.addf %2, %4 : vector<32x128xf32>
    %cst_5 = arith.constant 0.000000e+00 : f32
    %6 = vector.broadcast %cst_5 : f32 to vector<32x128xf32>
    %7 = arith.maximumf %5, %6 : vector<32x128xf32>
    %8 = arith.truncf %7 : vector<32x128xf32> to vector<32x128xbf16>
    %c0_6 = arith.constant 0 : index
    %c0_7 = arith.constant 0 : index
    %9 = vector.load %arg4[%c0_6, %c0_7] : memref<32x128xbf16, #tpu.memory_space<vmem>>, vector<32x128xbf16>
    tpu.vector_store %arg4[%c0_6, %c0_7], %8 {strides = array<i32>} : memref<32x128xbf16, #tpu.memory_space<vmem>>, vector<32x128xbf16>,
    return
  }
  func.func @transform_0(%arg0: i32) -> (i32, i32) {
    %c0_i32 = arith.constant 0 : i32
    %c0_i32_0 = arith.constant 0 : i32
    return %arg0, %c0_i32 : i32, i32
  }
  func.func @transform_1(%arg0: i32) -> (i32, i32) {
    %c0_i32 = arith.constant 0 : i32
    %c0_i32_0 = arith.constant 0 : i32
    %c0_i32_1 = arith.constant 0 : i32
    return %c0_i32, %c0_i32_0 : i32, i32
  }
  func.func @transform_2(%arg0: i32) -> (i32, i32) {
    %c0_i32 = arith.constant 0 : i32
    %c0_i32_0 = arith.constant 0 : i32
    %c0_i32_1 = arith.constant 0 : i32
    return %c0_i32, %c0_i32_0 : i32, i32
  }
  func.func @transform_3(%arg0: i32) -> (i32, i32) {
    %c0_i32 = arith.constant 0 : i32
    %c0_i32_0 = arith.constant 0 : i32
    return %arg0, %c0_i32 : i32, i32
  }
}

module attributes {stable_mosaic.version = 11 : i64} {
  func.func @_dense_kernel(%arg0: i32, %arg1: memref<128x384xbf16, #tpu.memory_space<vmem>>, %arg2: memref<384x128xbf16, #tpu.memory_space<vmem>>, %arg3: memref<1x128xf32, #tpu.memory_space<vmem>>, %arg4: memref<128x128xf32, #tpu.memory_space<vmem>>) attributes {dimension_semantics = [#tpu.dimension_semantics<parallel>], iteration_bounds = array<i64: 1>, scalar_prefetch = 0 : i64, scratch_operands = 0 : i64, tpu.core_type = #tpu.core_type<tc>, window_params = [{transform_indices = @transform_0, window_bounds = array<i64: 128, 384>}, {pipeline_mode = #tpu.pipeline_mode<synchronous>, transform_indices = @transform_1, window_bounds = array<i64: 384, 128>}, {pipeline_mode = #tpu.pipeline_mode<synchronous>, transform_indices = @transform_2, window_bounds = array<i64: 1, 128>}, {transform_indices = @transform_3, window_bounds = array<i64: 128, 128>}]} {
    %c0 = arith.constant 0 : index
    %c0_0 = arith.constant 0 : index
    %0 = vector.load %arg1[%c0, %c0_0] : memref<128x384xbf16, #tpu.memory_space<vmem>>, vector<128x384xbf16>
    %c0_1 = arith.constant 0 : index
    %c0_2 = arith.constant 0 : index
    %1 = vector.load %arg2[%c0_1, %c0_2] : memref<384x128xbf16, #tpu.memory_space<vmem>>, vector<384x128xbf16>
    %cst = arith.constant dense<0.000000e+00> : vector<128x128xf32>
    %2 = tpu.matmul %0, %1, %cst {dimension_numbers = #tpu.dot_dimension_numbers<[1], [0], [0], [1], [0, 0, 1, 1], [], []>} : vector<128x384xbf16>, vector<384x128xbf16>, vector<128x128xf32> -> vector<128x128xf32>
    %c0_3 = arith.constant 0 : index
    %c0_4 = arith.constant 0 : index
    %3 = vector.load %arg3[%c0_3, %c0_4] : memref<1x128xf32, #tpu.memory_space<vmem>>, vector<1x128xf32>
    %4 = vector.broadcast %3 : vector<1x128xf32> to vector<128x128xf32>
    %5 = arith.addf %2, %4 : vector<128x128xf32>
    %c0_5 = arith.constant 0 : index
    %c0_6 = arith.constant 0 : index
    %6 = vector.load %arg4[%c0_5, %c0_6] : memref<128x128xf32, #tpu.memory_space<vmem>>, vector<128x128xf32>
    tpu.vector_store %arg4[%c0_5, %c0_6], %5 {strides = array<i32>} : memref<128x128xf32, #tpu.memory_space<vmem>>, vector<128x128xf32>,
    return
  }
  func.func @transform_0(%arg0: i32) -> (i32, i32) {
    %c0_i32 = arith.constant 0 : i32
    %c0_i32_0 = arith.constant 0 : i32
    return %arg0, %c0_i32 : i32, i32
  }
  func.func @transform_1(%arg0: i32) -> (i32, i32) {
    %c0_i32 = arith.constant 0 : i32
    %c0_i32_0 = arith.constant 0 : i32
    %c0_i32_1 = arith.constant 0 : i32
    return %c0_i32, %c0_i32_0 : i32, i32
  }
  func.func @transform_2(%arg0: i32) -> (i32, i32) {
    %c0_i32 = arith.constant 0 : i32
    %c0_i32_0 = arith.constant 0 : i32
    %c0_i32_1 = arith.constant 0 : i32
    return %c0_i32, %c0_i32_0 : i32, i32
  }
  func.func @transform_3(%arg0: i32) -> (i32, i32) {
    %c0_i32 = arith.constant 0 : i32
    %c0_i32_0 = arith.constant 0 : i32
    return %arg0, %c0_i32 : i32, i32
  }
}

</mosaic_0001>

<llo_original>
// kernel: a_call__.4
$region0: #{a_call__.4}
  #allocation0 [shape = 'u32[]', space=smem, size = 0x4, offset = 0x4, fixed_abs, tag = 'smem constant byte address 0x4 - core index']
  #allocation1 [shape = 'u32[144,128]{1,0:T(1,128)}', space=vmem, size = 0x12000, scoped, tag = 'internal scratch']
  %s0 = inlined_call_operand.vmem [shape: bf16[128,128], index: 0, kind: input, shape index: {}]
  %s1 = inlined_call_operand.vmem [shape: bf16[128,128], index: 1, kind: input, shape index: {}]
  %s2 = inlined_call_operand.vmem [shape: f32[1,128], index: 2, kind: input, shape index: {}]
  %s3 = inlined_call_operand.vmem [shape: bf16[128,128], index: 3, kind: output, shape index: {}]
  %s4 = sld [smem:[#allocation0]]
  $region22: #{a_call__.4} parent=0
    _
  %s6 = ssub.s32 1, %s4
  %s7 = scalar_select 0, %s6, %s4
  // Predicated region
  $region2: #{a_call__.4} parent=0 // pred_check
    _
  $region3: #{a_call__.4} parent=0 // pred_check_branch
    %9 = sbr.rel (0) target = $region5
  $region4: #{a_call__.4} parent=0 // pred_region
    _
  $region5: #{a_call__.4} parent=0 // pred_fallthru
    _
  // Predicated region
  $region6: #{a_call__.4} parent=0 // pred_check
    _
  $region7: #{a_call__.4} parent=0 // pred_check_branch
    %11 = sbr.rel (0) target = $region9
  $region8: #{a_call__.4} parent=0 // pred_region
    _
  $region9: #{a_call__.4} parent=0 // pred_fallthru
    _
  // Predicated region
  $region10: #{a_call__.4} parent=0 // pred_check
    _
  $region11: #{a_call__.4} parent=0 // pred_check_branch
    %13 = sbr.rel (0) target = $region13
  $region12: #{a_call__.4} parent=0 // pred_region
    _
  $region13: #{a_call__.4} parent=0 // pred_fallthru
    _
  %v15 = vld [vmem:[%s0] sm:$0xf]
  %v16 = vld [vmem:[%s0 + $0x4] sm:$0xf]
  %v17 = vld [vmem:[%s0 + $0x8] sm:$0xf]
  %v18 = vld [vmem:[%s0 + $0xc] sm:$0xf]
  %v19 = vld [vmem:[%s0 + $0x10] sm:$0xf]
  %v20 = vld [vmem:[%s0 + $0x14] sm:$0xf]
  %v21 = vld [vmem:[%s0 + $0x18] sm:$0xf]
  %v22 = vld [vmem:[%s0 + $0x1c] sm:$0xf]
  %v23 = vld [vmem:[%s0 + $0x20] sm:$0xf]
  %v24 = vld [vmem:[%s0 + $0x24] sm:$0xf]
  %v25 = vld [vmem:[%s0 + $0x28] sm:$0xf]
  %v26 = vld [vmem:[%s0 + $0x2c] sm:$0xf]
  %v27 = vld [vmem:[%s0 + $0x30] sm:$0xf]
  %v28 = vld [vmem:[%s0 + $0x34] sm:$0xf]
  %v29 = vld [vmem:[%s0 + $0x38] sm:$0xf]
  %v30 = vld [vmem:[%s0 + $0x3c] sm:$0xf]
  %v31 = vld [vmem:[%s1] sm:$0xf]
  %v32 = vld [vmem:[%s1 + $0x4] sm:$0xf]
  %v33 = vld [vmem:[%s1 + $0x8] sm:$0xf]
  %v34 = vld [vmem:[%s1 + $0xc] sm:$0xf]
  %v35 = vld [vmem:[%s1 + $0x10] sm:$0xf]
  %v36 = vld [vmem:[%s1 + $0x14] sm:$0xf]
  %v37 = vld [vmem:[%s1 + $0x18] sm:$0xf]
  %v38 = vld [vmem:[%s1 + $0x1c] sm:$0xf]
  %v39 = vld [vmem:[%s1 + $0x20] sm:$0xf]
  %v40 = vld [vmem:[%s1 + $0x24] sm:$0xf]
  %v41 = vld [vmem:[%s1 + $0x28] sm:$0xf]
  %v42 = vld [vmem:[%s1 + $0x2c] sm:$0xf]
  %v43 = vld [vmem:[%s1 + $0x30] sm:$0xf]
  %v44 = vld [vmem:[%s1 + $0x34] sm:$0xf]
  %v45 = vld [vmem:[%s1 + $0x38] sm:$0xf]
  %v46 = vld [vmem:[%s1 + $0x3c] sm:$0xf]
  %v47 = vld [vmem:[%s2] sm:$0x1]
  %v49 = vlaneseq
  %v50 = vshrl.u32 %v49, 7
  %v51 = vsub.s32 0, %v50
  %v52 = vrot.slane %v47, %v51
  %v70 = vunpack.c.l.b16 %v15
  %v71 = vunpack.c.l.b16 %v16
  %v72 = vunpack.c.l.b16 %v17
  %v73 = vunpack.c.l.b16 %v18
  %v74 = vunpack.c.l.b16 %v19
  %v75 = vunpack.c.l.b16 %v20
  %v76 = vunpack.c.l.b16 %v21
  %v77 = vunpack.c.l.b16 %v22
  %v78 = vunpack.c.l.b16 %v23
  %v79 = vunpack.c.l.b16 %v24
  %v80 = vunpack.c.l.b16 %v25
  %v81 = vunpack.c.l.b16 %v26
  %v82 = vunpack.c.l.b16 %v27
  %v83 = vunpack.c.l.b16 %v28
  %v84 = vunpack.c.l.b16 %v29
  %v85 = vunpack.c.l.b16 %v30
  %v86 = vpack.c.b16 %v71, %v70
  %v87 = vpack.c.b16 %v73, %v72
  %v88 = vpack.c.b16 %v75, %v74
  %v89 = vpack.c.b16 %v77, %v76
  %v90 = vpack.c.b16 %v79, %v78
  %v91 = vpack.c.b16 %v81, %v80
  %v92 = vpack.c.b16 %v83, %v82
  %v93 = vpack.c.b16 %v85, %v84
  %v118 = vunpack.c.l.b16 %v31
  %v119 = vunpack.c.l.b16 %v32
  %v120 = vunpack.c.l.b16 %v33
  %v121 = vunpack.c.l.b16 %v34
  %v122 = vunpack.c.l.b16 %v35
  %v123 = vunpack.c.l.b16 %v36
  %v124 = vunpack.c.l.b16 %v37
  %v125 = vunpack.c.l.b16 %v38
  %v126 = vunpack.c.l.b16 %v39
  %v127 = vunpack.c.l.b16 %v40
  %v128 = vunpack.c.l.b16 %v41
  %v129 = vunpack.c.l.b16 %v42
  %v130 = vunpack.c.l.b16 %v43
  %v131 = vunpack.c.l.b16 %v44
  %v132 = vunpack.c.l.b16 %v45
  %v133 = vunpack.c.l.b16 %v46
  %v134 = vpack.c.b16 %v119, %v118
  %v135 = vpack.c.b16 %v121, %v120
  %v136 = vpack.c.b16 %v123, %v122
  %v137 = vpack.c.b16 %v125, %v124
  %v138 = vpack.c.b16 %v127, %v126
  %v139 = vpack.c.b16 %v129, %v128
  %v140 = vpack.c.b16 %v131, %v130
  %v141 = vpack.c.b16 %v133, %v132
  %150 = vmatprep.subr.bf16.mxu0 0
  %151 = vmatpush1.bf16.msra.mxu0 %v134
  %152 = vmatprep.subr.bf16.mxu0 0
  %153 = vmatpush1.bf16.msra.mxu0 %v135
  %154 = vmatprep.subr.bf16.mxu0 0
  %155 = vmatpush1.bf16.msra.mxu0 %v136
  %156 = vmatprep.subr.bf16.mxu0 0
  %157 = vmatpush1.bf16.msra.mxu0 %v137
  %158 = vmatprep.subr.bf16.mxu0 0
  %159 = vmatpush1.bf16.msra.mxu0 %v138
  %160 = vmatprep.subr.bf16.mxu0 0
  %161 = vmatpush1.bf16.msra.mxu0 %v139
  %162 = vmatprep.subr.bf16.mxu0 0
  %163 = vmatpush1.bf16.msra.mxu0 %v140
  %164 = vmatprep.subr.bf16.mxu0 0
  %165 = vmatpush1.bf16.msra.mxu0 %v141
  %166 = vmatprep.subr.bf16.mxu0 0
  %167 = vmatpush1.bf16.msra.mxu0 0
  %168 = vmatprep.subr.bf16.mxu0 0
  %169 = vmatpush1.bf16.msra.mxu0 0
  %170 = vmatprep.subr.bf16.mxu0 0
  %171 = vmatpush1.bf16.msra.mxu0 0
  %172 = vmatprep.subr.bf16.mxu0 0
  %173 = vmatpush1.bf16.msra.mxu0 0
  %174 = vmatprep.subr.bf16.mxu0 0
  %175 = vmatpush1.bf16.msra.mxu0 0
  %176 = vmatprep.subr.bf16.mxu0 0
  %177 = vmatpush1.bf16.msra.mxu0 0
  %178 = vmatprep.subr.bf16.mxu0 0
  %179 = vmatpush1.bf16.msra.mxu0 0
  %180 = vmatprep.subr.bf16.mxu0 0
  %181 = vmatpush1.bf16.msra.mxu0 0
  %182 = vmatprep.mubr.bf16.mxu0 0
  %183 = vmatmul.mubr.bf16.gmra.mrb[0].mxu0 %v86
  %v184 = vpop.f32.mrb[0].mxu0
  %v185 = vadd.f32 %v52, %v184
  %v186 = vpop.f32.mrb[0].mxu0
  %v187 = vpop.f32.mrb[0].mxu0
  %v188 = vadd.f32 %v52, %v187
  %v189 = vpop.f32.mrb[0].mxu0
  %190 = vmatprep.mubr.bf16.mxu0 0
  %191 = vmatmul.mubr.bf16.gmra.mrb[0].mxu0 %v87
  %v192 = vpop.f32.mrb[0].mxu0
  %v193 = vadd.f32 %v52, %v192
  %v194 = vpop.f32.mrb[0].mxu0
  %v195 = vpop.f32.mrb[0].mxu0
  %v196 = vadd.f32 %v52, %v195
  %v197 = vpop.f32.mrb[0].mxu0
  %198 = vmatprep.mubr.bf16.mxu0 0
  %199 = vmatmul.mubr.bf16.gmra.mrb[0].mxu0 %v88
  %v200 = vpop.f32.mrb[0].mxu0
  %v201 = vadd.f32 %v52, %v200
  %v202 = vpop.f32.mrb[0].mxu0
  %v203 = vpop.f32.mrb[0].mxu0
  %v204 = vadd.f32 %v52, %v203
  %v205 = vpop.f32.mrb[0].mxu0
  %206 = vmatprep.mubr.bf16.mxu0 0
  %207 = vmatmul.mubr.bf16.gmra.mrb[0].mxu0 %v89
  %v208 = vpop.f32.mrb[0].mxu0
  %v209 = vadd.f32 %v52, %v208
  %v210 = vpop.f32.mrb[0].mxu0
  %v211 = vpop.f32.mrb[0].mxu0
  %v212 = vadd.f32 %v52, %v211
  %v213 = vpop.f32.mrb[0].mxu0
  %214 = vmatprep.mubr.bf16.mxu0 0
  %215 = vmatmul.mubr.bf16.gmra.mrb[0].mxu0 %v90
  %v216 = vpop.f32.mrb[0].mxu0
  %v217 = vadd.f32 %v52, %v216
  %v218 = vpop.f32.mrb[0].mxu0
  %v219 = vpop.f32.mrb[0].mxu0
  %v220 = vadd.f32 %v52, %v219
  %v221 = vpop.f32.mrb[0].mxu0
  %222 = vmatprep.mubr.bf16.mxu0 0
  %223 = vmatmul.mubr.bf16.gmra.mrb[0].mxu0 %v91
  %v224 = vpop.f32.mrb[0].mxu0
  %v225 = vadd.f32 %v52, %v224
  %v226 = vpop.f32.mrb[0].mxu0
  %v227 = vpop.f32.mrb[0].mxu0
  %v228 = vadd.f32 %v52, %v227
  %v229 = vpop.f32.mrb[0].mxu0
  %230 = vmatprep.mubr.bf16.mxu0 0
  %231 = vmatmul.mubr.bf16.gmra.mrb[0].mxu0 %v92
  %v232 = vpop.f32.mrb[0].mxu0
  %v233 = vadd.f32 %v52, %v232
  %v234 = vpop.f32.mrb[0].mxu0
  %v235 = vpop.f32.mrb[0].mxu0
  %v236 = vadd.f32 %v52, %v235
  %v237 = vpop.f32.mrb[0].mxu0
  %238 = vmatprep.mubr.bf16.mxu0 0
  %239 = vmatmul.mubr.bf16.gmra.mrb[0].mxu0 %v93
  %v240 = vpop.f32.mrb[0].mxu0
  %v241 = vadd.f32 %v52, %v240
  %v242 = vpop.f32.mrb[0].mxu0
  %v243 = vpop.f32.mrb[0].mxu0
  %v244 = vadd.f32 %v52, %v243
  %v245 = vpop.f32.mrb[0].mxu0
  %246 = vdwg.mxu0
  %v247 = vmax.f32 %v185, 0.0
  %v248 = vmax.f32 %v188, 0.0
  %v249 = vmax.f32 %v193, 0.0
  %v250 = vmax.f32 %v196, 0.0
  %v251 = vmax.f32 %v201, 0.0
  %v252 = vmax.f32 %v204, 0.0
  %v253 = vmax.f32 %v209, 0.0
  %v254 = vmax.f32 %v212, 0.0
  %v255 = vmax.f32 %v217, 0.0
  %v256 = vmax.f32 %v220, 0.0
  %v257 = vmax.f32 %v225, 0.0
  %v258 = vmax.f32 %v228, 0.0
  %v259 = vmax.f32 %v233, 0.0
  %v260 = vmax.f32 %v236, 0.0
  %v261 = vmax.f32 %v241, 0.0
  %v262 = vmax.f32 %v244, 0.0
  %v263 = vpack.c.bf16 %v248, %v247
  %v264 = vpack.c.bf16 %v250, %v249
  %v265 = vpack.c.bf16 %v252, %v251
  %v266 = vpack.c.bf16 %v254, %v253
  %v267 = vpack.c.bf16 %v256, %v255
  %v268 = vpack.c.bf16 %v258, %v257
  %v269 = vpack.c.bf16 %v260, %v259
  %v270 = vpack.c.bf16 %v262, %v261
  %v279 = vunpack.c.l.b16 %v263
  %v280 = vunpack.c.h.b16 %v263
  %v281 = vunpack.c.l.b16 %v264
  %v282 = vunpack.c.h.b16 %v264
  %v283 = vunpack.c.l.b16 %v265
  %v284 = vunpack.c.h.b16 %v265
  %v285 = vunpack.c.l.b16 %v266
  %v286 = vunpack.c.h.b16 %v266
  %v287 = vunpack.c.l.b16 %v267
  %v288 = vunpack.c.h.b16 %v267
  %v289 = vunpack.c.l.b16 %v268
  %v290 = vunpack.c.h.b16 %v268
  %v291 = vunpack.c.l.b16 %v269
  %v292 = vunpack.c.h.b16 %v269
  %v293 = vunpack.c.l.b16 %v270
  %v294 = vunpack.c.h.b16 %v270
  %v295 = vpack.c.b16 %v279, %v279
  %v296 = vpack.c.b16 %v280, %v280
  %v297 = vpack.c.b16 %v281, %v281
  %v298 = vpack.c.b16 %v282, %v282
  %v299 = vpack.c.b16 %v283, %v283
  %v300 = vpack.c.b16 %v284, %v284
  %v301 = vpack.c.b16 %v285, %v285
  %v302 = vpack.c.b16 %v286, %v286
  %v303 = vpack.c.b16 %v287, %v287
  %v304 = vpack.c.b16 %v288, %v288
  %v305 = vpack.c.b16 %v289, %v289
  %v306 = vpack.c.b16 %v290, %v290
  %v307 = vpack.c.b16 %v291, %v291
  %v308 = vpack.c.b16 %v292, %v292
  %v309 = vpack.c.b16 %v293, %v293
  %v310 = vpack.c.b16 %v294, %v294
  %327 = vst [vmem:[%s3] sm:$0xf] %v295
  %328 = vst [vmem:[%s3 + $0x4] sm:$0xf] %v296
  %329 = vst [vmem:[%s3 + $0x8] sm:$0xf] %v297
  %330 = vst [vmem:[%s3 + $0xc] sm:$0xf] %v298
  %331 = vst [vmem:[%s3 + $0x10] sm:$0xf] %v299
  %332 = vst [vmem:[%s3 + $0x14] sm:$0xf] %v300
  %333 = vst [vmem:[%s3 + $0x18] sm:$0xf] %v301
  %334 = vst [vmem:[%s3 + $0x1c] sm:$0xf] %v302
  %335 = vst [vmem:[%s3 + $0x20] sm:$0xf] %v303
  %336 = vst [vmem:[%s3 + $0x24] sm:$0xf] %v304
  %337 = vst [vmem:[%s3 + $0x28] sm:$0xf] %v305
  %338 = vst [vmem:[%s3 + $0x2c] sm:$0xf] %v306
  %339 = vst [vmem:[%s3 + $0x30] sm:$0xf] %v307
  %340 = vst [vmem:[%s3 + $0x34] sm:$0xf] %v308
  %341 = vst [vmem:[%s3 + $0x38] sm:$0xf] %v309
  %342 = vst [vmem:[%s3 + $0x3c] sm:$0xf] %v310
  // Predicated region
  $region14: #{a_call__.4} parent=0 // pred_check
    _
  $region15: #{a_call__.4} parent=0 // pred_check_branch
    %344 = sbr.rel (0) target = $region17
  $region16: #{a_call__.4} parent=0 // pred_region
    _
  $region17: #{a_call__.4} parent=0 // pred_fallthru
    _
  // Predicated region
  $region18: #{a_call__.4} parent=0 // pred_check
    _
  $region19: #{a_call__.4} parent=0 // pred_check_branch
    %346 = sbr.rel (0) target = $region21
  $region20: #{a_call__.4} parent=0 // pred_region
    _
  $region21: #{a_call__.4} parent=0 // pred_fallthru
    _

// kernel: a_call__.5
$region0: #{a_call__.5}
  #allocation0 [shape = 'u32[]', space=smem, size = 0x4, offset = 0x4, fixed_abs, tag = 'smem constant byte address 0x4 - core index']
  #allocation1 [shape = 'u32[144,128]{1,0:T(1,128)}', space=vmem, size = 0x12000, scoped, tag = 'internal scratch']
  %s0 = inlined_call_operand.vmem [shape: bf16[32,896], index: 0, kind: input, shape index: {}]
  %s1 = inlined_call_operand.vmem [shape: bf16[896,128], index: 1, kind: input, shape index: {}]
  %s2 = inlined_call_operand.vmem [shape: f32[1,128], index: 2, kind: input, shape index: {}]
  %s3 = inlined_call_operand.vmem [shape: f32[1,128], index: 3, kind: input, shape index: {}]
  %s4 = inlined_call_operand.vmem [shape: f32[1,128], index: 4, kind: input, shape index: {}]
  %s5 = inlined_call_operand.vmem [shape: f32[1,128], index: 5, kind: input, shape index: {}]
  %s6 = inlined_call_operand.vmem [shape: f32[32,128], index: 6, kind: output, shape index: {0}]
  %s7 = inlined_call_operand.hbm [shape: f32[32,128], index: 7, kind: output, shape index: {1}]
  %s8 = inlined_call_operand.vmem [shape: f32[8,128], index: 8, kind: output, shape index: {2}]
  %9 = xla_tuple %s6, %s7, %s8
  %s10 = sld [smem:[#allocation0]]
  $region50: #{a_call__.5} parent=0
    _
  %s12 = ssub.s32 1, %s10
  %s13 = scalar_select 0, %s12, %s10
  $region1: #{a_call__.5} parent=0
    #allocation2 [shape = 'u8[16384]{0}', space=vmem, size = 0x4000, scoped, tag = 'output window, operand 1, single buffered']
    #allocation3 [shape = 's32[1]{0}', space=sflag, size = 0x4, scoped, tag = 'scoped memory for a_call__.5']
    %14 = vsyncpa [#allocation3], 0
    // Predicated region
    $region2: #{a_call__.5} parent=1 // pred_check
      _
    $region3: #{a_call__.5} parent=1 // pred_check_branch
      %16 = sbr.rel (0) target = $region5
    $region4: #{a_call__.5} parent=1 // pred_region
      _
    $region5: #{a_call__.5} parent=1 // pred_fallthru
      _
    // Predicated region
    $region6: #{a_call__.5} parent=1 // pred_check
      _
    $region7: #{a_call__.5} parent=1 // pred_check_branch
      %18 = sbr.rel (0) target = $region9
    $region8: #{a_call__.5} parent=1 // pred_region
      _
    $region9: #{a_call__.5} parent=1 // pred_fallthru
      _
    // Predicated region
    $region10: #{a_call__.5} parent=1 // pred_check
      _
    $region11: #{a_call__.5} parent=1 // pred_check_branch
      %20 = sbr.rel (0) target = $region13
    $region12: #{a_call__.5} parent=1 // pred_region
      _
    $region13: #{a_call__.5} parent=1 // pred_fallthru
      _
    // Predicated region
    $region14: #{a_call__.5} parent=1 // pred_check
      _
    $region15: #{a_call__.5} parent=1 // pred_check_branch
      %22 = sbr.rel (0) target = $region17
    $region16: #{a_call__.5} parent=1 // pred_region
      _
    $region17: #{a_call__.5} parent=1 // pred_fallthru
      _
    // Predicated region
    $region18: #{a_call__.5} parent=1 // pred_check
      _
    $region19: #{a_call__.5} parent=1 // pred_check_branch
      %24 = sbr.rel (0) target = $region21
    $region20: #{a_call__.5} parent=1 // pred_region
      _
    $region21: #{a_call__.5} parent=1 // pred_fallthru
      _
    // Predicated region
    $region22: #{a_call__.5} parent=1 // pred_check
      _
    $region23: #{a_call__.5} parent=1 // pred_check_branch
      %26 = sbr.rel (0) target = $region25
    $region24: #{a_call__.5} parent=1 // pred_region
      _
    $region25: #{a_call__.5} parent=1 // pred_fallthru
      _
    %v28 = vld [vmem:[%s0] sm:$0xff]
    %v29 = vld [vmem:[%s0 + $0x8] sm:$0xff]
    %v30 = vld [vmem:[%s0 + $0x10] sm:$0xff]
    %v31 = vld [vmem:[%s0 + $0x18] sm:$0xf]
    %v32 = vld [vmem:[%s0 + $0x1c] sm:$0xff]
    %v33 = vld [vmem:[%s0 + $0x24] sm:$0xff]
    %v34 = vld [vmem:[%s0 + $0x2c] sm:$0xff]
    %v35 = vld [vmem:[%s0 + $0x34] sm:$0xf]
    %v36 = vld [vmem:[%s0 + $0x38] sm:$0xff]
    %v37 = vld [vmem:[%s0 + $0x40] sm:$0xff]
    %v38 = vld [vmem:[%s0 + $0x48] sm:$0xff]
    %v39 = vld [vmem:[%s0 + $0x50] sm:$0xf]
    %v40 = vld [vmem:[%s0 + $0x54] sm:$0xff]
    %v41 = vld [vmem:[%s0 + $0x5c] sm:$0xff]
    %v42 = vld [vmem:[%s0 + $0x64] sm:$0xff]
    %v43 = vld [vmem:[%s0 + $0x6c] sm:$0xf]
    %v44 = vld [vmem:[%s1] sm:$0xf]
    %v45 = vld [vmem:[%s1 + $0x4] sm:$0xf]
    %v46 = vld [vmem:[%s1 + $0x8] sm:$0xf]
    %v47 = vld [vmem:[%s1 + $0xc] sm:$0xf]
    %v48 = vld [vmem:[%s1 + $0x10] sm:$0xf]
    %v49 = vld [vmem:[%s1 + $0x14] sm:$0xf]
    %v50 = vld [vmem:[%s1 + $0x18] sm:$0xf]
    %v51 = vld [vmem:[%s1 + $0x1c] sm:$0xf]
    %v52 = vld [vmem:[%s1 + $0x20] sm:$0xf]
    %v53 = vld [vmem:[%s1 + $0x24] sm:$0xf]
    %v54 = vld [vmem:[%s1 + $0x28] sm:$0xf]
    %v55 = vld [vmem:[%s1 + $0x2c] sm:$0xf]
    %v56 = vld [vmem:[%s1 + $0x30] sm:$0xf]
    %v57 = vld [vmem:[%s1 + $0x34] sm:$0xf]
    %v58 = vld [vmem:[%s1 + $0x38] sm:$0xf]
    %v59 = vld [vmem:[%s1 + $0x3c] sm:$0xf]
    %v60 = vld [vmem:[%s1 + $0x40] sm:$0xf]
    %v61 = vld [vmem:[%s1 + $0x44] sm:$0xf]
    %v62 = vld [vmem:[%s1 + $0x48] sm:$0xf]
    %v63 = vld [vmem:[%s1 + $0x4c] sm:$0xf]
    %v64 = vld [vmem:[%s1 + $0x50] sm:$0xf]
    %v65 = vld [vmem:[%s1 + $0x54] sm:$0xf]
    %v66 = vld [vmem:[%s1 + $0x58] sm:$0xf]
    %v67 = vld [vmem:[%s1 + $0x5c] sm:$0xf]
    %v68 = vld [vmem:[%s1 + $0x60] sm:$0xf]
    %v69 = vld [vmem:[%s1 + $0x64] sm:$0xf]
    %v70 = vld [vmem:[%s1 + $0x68] sm:$0xf]
    %v71 = vld [vmem:[%s1 + $0x6c] sm:$0xf]
    %v72 = vld [vmem:[%s1 + $0x70] sm:$0xf]
    %v73 = vld [vmem:[%s1 + $0x74] sm:$0xf]
    %v74 = vld [vmem:[%s1 + $0x78] sm:$0xf]
    %v75 = vld [vmem:[%s1 + $0x7c] sm:$0xf]
    %v76 = vld [vmem:[%s1 + $0x80] sm:$0xf]
    %v77 = vld [vmem:[%s1 + $0x84] sm:$0xf]
    %v78 = vld [vmem:[%s1 + $0x88] sm:$0xf]
    %v79 = vld [vmem:[%s1 + $0x8c] sm:$0xf]
    %v80 = vld [vmem:[%s1 + $0x90] sm:$0xf]
    %v81 = vld [vmem:[%s1 + $0x94] sm:$0xf]
    %v82 = vld [vmem:[%s1 + $0x98] sm:$0xf]
    %v83 = vld [vmem:[%s1 + $0x9c] sm:$0xf]
    %v84 = vld [vmem:[%s1 + $0xa0] sm:$0xf]
    %v85 = vld [vmem:[%s1 + $0xa4] sm:$0xf]
    %v86 = vld [vmem:[%s1 + $0xa8] sm:$0xf]
    %v87 = vld [vmem:[%s1 + $0xac] sm:$0xf]
    %v88 = vld [vmem:[%s1 + $0xb0] sm:$0xf]
    %v89 = vld [vmem:[%s1 + $0xb4] sm:$0xf]
    %v90 = vld [vmem:[%s1 + $0xb8] sm:$0xf]
    %v91 = vld [vmem:[%s1 + $0xbc] sm:$0xf]
    %v92 = vld [vmem:[%s1 + $0xc0] sm:$0xf]
    %v93 = vld [vmem:[%s1 + $0xc4] sm:$0xf]
    %v94 = vld [vmem:[%s1 + $0xc8] sm:$0xf]
    %v95 = vld [vmem:[%s1 + $0xcc] sm:$0xf]
    %v96 = vld [vmem:[%s1 + $0xd0] sm:$0xf]
    %v97 = vld [vmem:[%s1 + $0xd4] sm:$0xf]
    %v98 = vld [vmem:[%s1 + $0xd8] sm:$0xf]
    %v99 = vld [vmem:[%s1 + $0xdc] sm:$0xf]
    %v100 = vld [vmem:[%s1 + $0xe0] sm:$0xf]
    %v101 = vld [vmem:[%s1 + $0xe4] sm:$0xf]
    %v102 = vld [vmem:[%s1 + $0xe8] sm:$0xf]
    %v103 = vld [vmem:[%s1 + $0xec] sm:$0xf]
    %v104 = vld [vmem:[%s1 + $0xf0] sm:$0xf]
    %v105 = vld [vmem:[%s1 + $0xf4] sm:$0xf]
    %v106 = vld [vmem:[%s1 + $0xf8] sm:$0xf]
    %v107 = vld [vmem:[%s1 + $0xfc] sm:$0xf]
    %v108 = vld [vmem:[%s1 + $0x100] sm:$0xf]
    %v109 = vld [vmem:[%s1 + $0x104] sm:$0xf]
    %v110 = vld [vmem:[%s1 + $0x108] sm:$0xf]
    %v111 = vld [vmem:[%s1 + $0x10c] sm:$0xf]
    %v112 = vld [vmem:[%s1 + $0x110] sm:$0xf]
    %v113 = vld [vmem:[%s1 + $0x114] sm:$0xf]
    %v114 = vld [vmem:[%s1 + $0x118] sm:$0xf]
    %v115 = vld [vmem:[%s1 + $0x11c] sm:$0xf]
    %v116 = vld [vmem:[%s1 + $0x120] sm:$0xf]
    %v117 = vld [vmem:[%s1 + $0x124] sm:$0xf]
    %v118 = vld [vmem:[%s1 + $0x128] sm:$0xf]
    %v119 = vld [vmem:[%s1 + $0x12c] sm:$0xf]
    %v120 = vld [vmem:[%s1 + $0x130] sm:$0xf]
    %v121 = vld [vmem:[%s1 + $0x134] sm:$0xf]
    %v122 = vld [vmem:[%s1 + $0x138] sm:$0xf]
    %v123 = vld [vmem:[%s1 + $0x13c] sm:$0xf]
    %v124 = vld [vmem:[%s1 + $0x140] sm:$0xf]
    %v125 = vld [vmem:[%s1 + $0x144] sm:$0xf]
    %v126 = vld [vmem:[%s1 + $0x148] sm:$0xf]
    %v127 = vld [vmem:[%s1 + $0x14c] sm:$0xf]
    %v128 = vld [vmem:[%s1 + $0x150] sm:$0xf]
    %v129 = vld [vmem:[%s1 + $0x154] sm:$0xf]
    %v130 = vld [vmem:[%s1 + $0x158] sm:$0xf]
    %v131 = vld [vmem:[%s1 + $0x15c] sm:$0xf]
    %v132 = vld [vmem:[%s1 + $0x160] sm:$0xf]
    %v133 = vld [vmem:[%s1 + $0x164] sm:$0xf]
    %v134 = vld [vmem:[%s1 + $0x168] sm:$0xf]
    %v135 = vld [vmem:[%s1 + $0x16c] sm:$0xf]
    %v136 = vld [vmem:[%s1 + $0x170] sm:$0xf]
    %v137 = vld [vmem:[%s1 + $0x174] sm:$0xf]
    %v138 = vld [vmem:[%s1 + $0x178] sm:$0xf]
    %v139 = vld [vmem:[%s1 + $0x17c] sm:$0xf]
    %v140 = vld [vmem:[%s1 + $0x180] sm:$0xf]
    %v141 = vld [vmem:[%s1 + $0x184] sm:$0xf]
    %v142 = vld [vmem:[%s1 + $0x188] sm:$0xf]
    %v143 = vld [vmem:[%s1 + $0x18c] sm:$0xf]
    %v144 = vld [vmem:[%s1 + $0x190] sm:$0xf]
    %v145 = vld [vmem:[%s1 + $0x194] sm:$0xf]
    %v146 = vld [vmem:[%s1 + $0x198] sm:$0xf]
    %v147 = vld [vmem:[%s1 + $0x19c] sm:$0xf]
    %v148 = vld [vmem:[%s1 + $0x1a0] sm:$0xf]
    %v149 = vld [vmem:[%s1 + $0x1a4] sm:$0xf]
    %v150 = vld [vmem:[%s1 + $0x1a8] sm:$0xf]
    %v151 = vld [vmem:[%s1 + $0x1ac] sm:$0xf]
    %v152 = vld [vmem:[%s1 + $0x1b0] sm:$0xf]
    %v153 = vld [vmem:[%s1 + $0x1b4] sm:$0xf]
    %v154 = vld [vmem:[%s1 + $0x1b8] sm:$0xf]
    %v155 = vld [vmem:[%s1 + $0x1bc] sm:$0xf]
    %v156 = vld [vmem:[%s2] sm:$0x1]
    %v158 = vlaneseq
    %v159 = vshrl.u32 %v158, 7
    %v160 = vsub.s32 0, %v159
    %v161 = vrot.slane %v156, %v160
    %v179 = vunpack.c.l.b16 %v28
    %v180 = vunpack.c.h.b16 %v28
    %v181 = vunpack.c.l.b16 %v29
    %v182 = vunpack.c.h.b16 %v29
    %v183 = vunpack.c.l.b16 %v30
    %v184 = vunpack.c.h.b16 %v30
    %v185 = vunpack.c.l.b16 %v31
    %v186 = vunpack.c.l.b16 %v32
    %v187 = vunpack.c.h.b16 %v32
    %v188 = vunpack.c.l.b16 %v33
    %v189 = vunpack.c.h.b16 %v33
    %v190 = vunpack.c.l.b16 %v34
    %v191 = vunpack.c.h.b16 %v34
    %v192 = vunpack.c.l.b16 %v35
    %v193 = vunpack.c.l.b16 %v36
    %v194 = vunpack.c.h.b16 %v36
    %v195 = vunpack.c.l.b16 %v37
    %v196 = vunpack.c.h.b16 %v37
    %v197 = vunpack.c.l.b16 %v38
    %v198 = vunpack.c.h.b16 %v38
    %v199 = vunpack.c.l.b16 %v39
    %v200 = vunpack.c.l.b16 %v40
    %v201 = vunpack.c.h.b16 %v40
    %v202 = vunpack.c.l.b16 %v41
    %v203 = vunpack.c.h.b16 %v41
    %v204 = vunpack.c.l.b16 %v42
    %v205 = vunpack.c.h.b16 %v42
    %v206 = vunpack.c.l.b16 %v43
    %v207 = vpack.c.b16 %v186, %v179
    %v208 = vpack.c.b16 %v187, %v180
    %v209 = vpack.c.b16 %v188, %v181
    %v210 = vpack.c.b16 %v189, %v182
    %v211 = vpack.c.b16 %v190, %v183
    %v212 = vpack.c.b16 %v191, %v184
    %v213 = vpack.c.b16 %v192, %v185
    %v214 = vpack.c.b16 %v200, %v193
    %v215 = vpack.c.b16 %v201, %v194
    %v216 = vpack.c.b16 %v202, %v195
    %v217 = vpack.c.b16 %v203, %v196
    %v218 = vpack.c.b16 %v204, %v197
    %v219 = vpack.c.b16 %v205, %v198
    %v220 = vpack.c.b16 %v206, %v199
    %v347 = vunpack.c.l.b16 %v44
    %v348 = vunpack.c.l.b16 %v45
    %v349 = vunpack.c.l.b16 %v46
    %v350 = vunpack.c.l.b16 %v47
    %v351 = vunpack.c.l.b16 %v48
    %v352 = vunpack.c.l.b16 %v49
    %v353 = vunpack.c.l.b16 %v50
    %v354 = vunpack.c.l.b16 %v51
    %v355 = vunpack.c.l.b16 %v52
    %v356 = vunpack.c.l.b16 %v53
    %v357 = vunpack.c.l.b16 %v54
    %v358 = vunpack.c.l.b16 %v55
    %v359 = vunpack.c.l.b16 %v56
    %v360 = vunpack.c.l.b16 %v57
    %v361 = vunpack.c.l.b16 %v58
    %v362 = vunpack.c.l.b16 %v59
    %v363 = vunpack.c.l.b16 %v60
    %v364 = vunpack.c.l.b16 %v61
    %v365 = vunpack.c.l.b16 %v62
    %v366 = vunpack.c.l.b16 %v63
    %v367 = vunpack.c.l.b16 %v64
    %v368 = vunpack.c.l.b16 %v65
    %v369 = vunpack.c.l.b16 %v66
    %v370 = vunpack.c.l.b16 %v67
    %v371 = vunpack.c.l.b16 %v68
    %v372 = vunpack.c.l.b16 %v69
    %v373 = vunpack.c.l.b16 %v70
    %v374 = vunpack.c.l.b16 %v71
    %v375 = vunpack.c.l.b16 %v72
    %v376 = vunpack.c.l.b16 %v73
    %v377 = vunpack.c.l.b16 %v74
    %v378 = vunpack.c.l.b16 %v75
    %v379 = vunpack.c.l.b16 %v76
    %v380 = vunpack.c.l.b16 %v77
    %v381 = vunpack.c.l.b16 %v78
    %v382 = vunpack.c.l.b16 %v79
    %v383 = vunpack.c.l.b16 %v80
    %v384 = vunpack.c.l.b16 %v81
    %v385 = vunpack.c.l.b16 %v82
    %v386 = vunpack.c.l.b16 %v83
    %v387 = vunpack.c.l.b16 %v84
    %v388 = vunpack.c.l.b16 %v85
    %v389 = vunpack.c.l.b16 %v86
    %v390 = vunpack.c.l.b16 %v87
    %v391 = vunpack.c.l.b16 %v88
    %v392 = vunpack.c.l.b16 %v89
    %v393 = vunpack.c.l.b16 %v90
    %v394 = vunpack.c.l.b16 %v91
    %v395 = vunpack.c.l.b16 %v92
    %v396 = vunpack.c.l.b16 %v93
    %v397 = vunpack.c.l.b16 %v94
    %v398 = vunpack.c.l.b16 %v95
    %v399 = vunpack.c.l.b16 %v96
    %v400 = vunpack.c.l.b16 %v97
    %v401 = vunpack.c.l.b16 %v98
    %v402 = vunpack.c.l.b16 %v99
    %v403 = vunpack.c.l.b16 %v100
    %v404 = vunpack.c.l.b16 %v101
    %v405 = vunpack.c.l.b16 %v102
    %v406 = vunpack.c.l.b16 %v103
    %v407 = vunpack.c.l.b16 %v104
    %v408 = vunpack.c.l.b16 %v105
    %v409 = vunpack.c.l.b16 %v106
    %v410 = vunpack.c.l.b16 %v107
    %v411 = vunpack.c.l.b16 %v108
    %v412 = vunpack.c.l.b16 %v109
    %v413 = vunpack.c.l.b16 %v110
    %v414 = vunpack.c.l.b16 %v111
    %v415 = vunpack.c.l.b16 %v112
    %v416 = vunpack.c.l.b16 %v113
    %v417 = vunpack.c.l.b16 %v114
    %v418 = vunpack.c.l.b16 %v115
    %v419 = vunpack.c.l.b16 %v116
    %v420 = vunpack.c.l.b16 %v117
    %v421 = vunpack.c.l.b16 %v118
    %v422 = vunpack.c.l.b16 %v119
    %v423 = vunpack.c.l.b16 %v120
    %v424 = vunpack.c.l.b16 %v121
    %v425 = vunpack.c.l.b16 %v122
    %v426 = vunpack.c.l.b16 %v123
    %v427 = vunpack.c.l.b16 %v124
    %v428 = vunpack.c.l.b16 %v125
    %v429 = vunpack.c.l.b16 %v126
    %v430 = vunpack.c.l.b16 %v127
    %v431 = vunpack.c.l.b16 %v128
    %v432 = vunpack.c.l.b16 %v129
    %v433 = vunpack.c.l.b16 %v130
    %v434 = vunpack.c.l.b16 %v131
    %v435 = vunpack.c.l.b16 %v132
    %v436 = vunpack.c.l.b16 %v133
    %v437 = vunpack.c.l.b16 %v134
    %v438 = vunpack.c.l.b16 %v135
    %v439 = vunpack.c.l.b16 %v136
    %v440 = vunpack.c.l.b16 %v137
    %v441 = vunpack.c.l.b16 %v138
    %v442 = vunpack.c.l.b16 %v139
    %v443 = vunpack.c.l.b16 %v140
    %v444 = vunpack.c.l.b16 %v141
    %v445 = vunpack.c.l.b16 %v142
    %v446 = vunpack.c.l.b16 %v143
    %v447 = vunpack.c.l.b16 %v144
    %v448 = vunpack.c.l.b16 %v145
    %v449 = vunpack.c.l.b16 %v146
    %v450 = vunpack.c.l.b16 %v147
    %v451 = vunpack.c.l.b16 %v148
    %v452 = vunpack.c.l.b16 %v149
    %v453 = vunpack.c.l.b16 %v150
    %v454 = vunpack.c.l.b16 %v151
    %v455 = vunpack.c.l.b16 %v152
    %v456 = vunpack.c.l.b16 %v153
    %v457 = vunpack.c.l.b16 %v154
    %v458 = vunpack.c.l.b16 %v155
    %v459 = vpack.c.b16 %v348, %v347
    %v460 = vpack.c.b16 %v350, %v349
    %v461 = vpack.c.b16 %v352, %v351
    %v462 = vpack.c.b16 %v354, %v353
    %v463 = vpack.c.b16 %v356, %v355
    %v464 = vpack.c.b16 %v358, %v357
    %v465 = vpack.c.b16 %v360, %v359
    %v466 = vpack.c.b16 %v362, %v361
    %v467 = vpack.c.b16 %v364, %v363
    %v468 = vpack.c.b16 %v366, %v365
    %v469 = vpack.c.b16 %v368, %v367
    %v470 = vpack.c.b16 %v370, %v369
    %v471 = vpack.c.b16 %v372, %v371
    %v472 = vpack.c.b16 %v374, %v373
    %v473 = vpack.c.b16 %v376, %v375
    %v474 = vpack.c.b16 %v378, %v377
    %v475 = vpack.c.b16 %v380, %v379
    %v476 = vpack.c.b16 %v382, %v381
    %v477 = vpack.c.b16 %v384, %v383
    %v478 = vpack.c.b16 %v386, %v385
    %v479 = vpack.c.b16 %v388, %v387
    %v480 = vpack.c.b16 %v390, %v389
    %v481 = vpack.c.b16 %v392, %v391
    %v482 = vpack.c.b16 %v394, %v393
    %v483 = vpack.c.b16 %v396, %v395
    %v484 = vpack.c.b16 %v398, %v397
    %v485 = vpack.c.b16 %v400, %v399
    %v486 = vpack.c.b16 %v402, %v401
    %v487 = vpack.c.b16 %v404, %v403
    %v488 = vpack.c.b16 %v406, %v405
    %v489 = vpack.c.b16 %v408, %v407
    %v490 = vpack.c.b16 %v410, %v409
    %v491 = vpack.c.b16 %v412, %v411
    %v492 = vpack.c.b16 %v414, %v413
    %v493 = vpack.c.b16 %v416, %v415
    %v494 = vpack.c.b16 %v418, %v417
    %v495 = vpack.c.b16 %v420, %v419
    %v496 = vpack.c.b16 %v422, %v421
    %v497 = vpack.c.b16 %v424, %v423
    %v498 = vpack.c.b16 %v426, %v425
    %v499 = vpack.c.b16 %v428, %v427
    %v500 = vpack.c.b16 %v430, %v429
    %v501 = vpack.c.b16 %v432, %v431
    %v502 = vpack.c.b16 %v434, %v433
    %v503 = vpack.c.b16 %v436, %v435
    %v504 = vpack.c.b16 %v438, %v437
    %v505 = vpack.c.b16 %v440, %v439
    %v506 = vpack.c.b16 %v442, %v441
    %v507 = vpack.c.b16 %v444, %v443
    %v508 = vpack.c.b16 %v446, %v445
    %v509 = vpack.c.b16 %v448, %v447
    %v510 = vpack.c.b16 %v450, %v449
    %v511 = vpack.c.b16 %v452, %v451
    %v512 = vpack.c.b16 %v454, %v453
    %v513 = vpack.c.b16 %v456, %v455
    %v514 = vpack.c.b16 %v458, %v457
    %571 = vmatprep.subr.bf16.mxu0 0
    %572 = vmatpush1.bf16.msra.mxu0 %v459
    %573 = vmatprep.subr.bf16.mxu0 0
    %574 = vmatpush1.bf16.msra.mxu0 %v460
    %575 = vmatprep.subr.bf16.mxu0 0
    %576 = vmatpush1.bf16.msra.mxu0 %v461
    %577 = vmatprep.subr.bf16.mxu0 0
    %578 = vmatpush1.bf16.msra.mxu0 %v462
    %579 = vmatprep.subr.bf16.mxu0 0
    %580 = vmatpush1.bf16.msra.mxu0 %v463
    %581 = vmatprep.subr.bf16.mxu0 0
    %582 = vmatpush1.bf16.msra.mxu0 %v464
    %583 = vmatprep.subr.bf16.mxu0 0
    %584 = vmatpush1.bf16.msra.mxu0 %v465
    %585 = vmatprep.subr.bf16.mxu0 0
    %586 = vmatpush1.bf16.msra.mxu0 %v466
    %587 = vmatprep.subr.bf16.mxu0 0
    %588 = vmatpush1.bf16.msra.mxu0 %v467
    %589 = vmatprep.subr.bf16.mxu0 0
    %590 = vmatpush1.bf16.msra.mxu0 %v468
    %591 = vmatprep.subr.bf16.mxu0 0
    %592 = vmatpush1.bf16.msra.mxu0 %v469
    %593 = vmatprep.subr.bf16.mxu0 0
    %594 = vmatpush1.bf16.msra.mxu0 %v470
    %595 = vmatprep.subr.bf16.mxu0 0
    %596 = vmatpush1.bf16.msra.mxu0 %v471
    %597 = vmatprep.subr.bf16.mxu0 0
    %598 = vmatpush1.bf16.msra.mxu0 %v472
    %599 = vmatprep.subr.bf16.mxu0 0
    %600 = vmatpush1.bf16.msra.mxu0 %v473
    %601 = vmatprep.subr.bf16.mxu0 0
    %602 = vmatpush1.bf16.msra.mxu0 %v474
    %603 = vmatprep.mubr.bf16.mxu0 %v208
    %604 = vmatmul.mubr.bf16.gmra.mrb[0].mxu0 %v207
    %v605 = vpop.f32.mrb[0].mxu0
    %v606 = vadd.f32 %v161, %v605
    %v607 = vpop.f32.mrb[0].mxu0
    %v608 = vpop.f32.mrb[0].mxu0
    %v609 = vadd.f32 %v161, %v608
    %v610 = vpop.f32.mrb[0].mxu0
    %611 = vmatprep.mubr.bf16.mxu0 %v215
    %612 = vmatmul.mubr.bf16.gmra.mrb[0].mxu0 %v214
    %v613 = vpop.f32.mrb[0].mxu0
    %v614 = vadd.f32 %v161, %v613
    %v615 = vpop.f32.mrb[0].mxu0
    %v616 = vpop.f32.mrb[0].mxu0
    %v617 = vadd.f32 %v161, %v616
    %v618 = vpop.f32.mrb[0].mxu0
    %619 = vdwg.mxu0
    %620 = vmatprep.subr.bf16.mxu0 0
    %621 = vmatpush1.bf16.msra.mxu0 %v475
    %622 = vmatprep.subr.bf16.mxu0 0
    %623 = vmatpush1.bf16.msra.mxu0 %v476
    %624 = vmatprep.subr.bf16.mxu0 0
    %625 = vmatpush1.bf16.msra.mxu0 %v477
    %626 = vmatprep.subr.bf16.mxu0 0
    %627 = vmatpush1.bf16.msra.mxu0 %v478
    %628 = vmatprep.subr.bf16.mxu0 0
    %629 = vmatpush1.bf16.msra.mxu0 %v479
    %630 = vmatprep.subr.bf16.mxu0 0
    %631 = vmatpush1.bf16.msra.mxu0 %v480
    %632 = vmatprep.subr.bf16.mxu0 0
    %633 = vmatpush1.bf16.msra.mxu0 %v481
    %634 = vmatprep.subr.bf16.mxu0 0
    %635 = vmatpush1.bf16.msra.mxu0 %v482
    %636 = vmatprep.subr.bf16.mxu0 0
    %637 = vmatpush1.bf16.msra.mxu0 %v483
    %638 = vmatprep.subr.bf16.mxu0 0
    %639 = vmatpush1.bf16.msra.mxu0 %v484
    %640 = vmatprep.subr.bf16.mxu0 0
    %641 = vmatpush1.bf16.msra.mxu0 %v485
    %642 = vmatprep.subr.bf16.mxu0 0
    %643 = vmatpush1.bf16.msra.mxu0 %v486
    %644 = vmatprep.subr.bf16.mxu0 0
    %645 = vmatpush1.bf16.msra.mxu0 %v487
    %646 = vmatprep.subr.bf16.mxu0 0
    %647 = vmatpush1.bf16.msra.mxu0 %v488
    %648 = vmatprep.subr.bf16.mxu0 0
    %649 = vmatpush1.bf16.msra.mxu0 %v489
    %650 = vmatprep.subr.bf16.mxu0 0
    %651 = vmatpush1.bf16.msra.mxu0 %v490
    %652 = vmatprep.mubr.bf16.mxu0 %v210
    %653 = vmatmul.mubr.bf16.gmra.mrb[0].mxu0 %v209
    %v654 = vpop.f32.mrb[0].mxu0
    %v655 = vadd.f32 %v606, %v654
    %v656 = vpop.f32.mrb[0].mxu0
    %v657 = vpop.f32.mrb[0].mxu0
    %v658 = vadd.f32 %v609, %v657
    %v659 = vpop.f32.mrb[0].mxu0
    %660 = vmatprep.mubr.bf16.mxu0 %v217
    %661 = vmatmul.mubr.bf16.gmra.mrb[0].mxu0 %v216
    %v662 = vpop.f32.mrb[0].mxu0
    %v663 = vadd.f32 %v614, %v662
    %v664 = vpop.f32.mrb[0].mxu0
    %v665 = vpop.f32.mrb[0].mxu0
    %v666 = vadd.f32 %v617, %v665
    %v667 = vpop.f32.mrb[0].mxu0
    %668 = vdwg.mxu0
    %669 = vmatprep.subr.bf16.mxu0 0
    %670 = vmatpush1.bf16.msra.mxu0 %v491
    %671 = vmatprep.subr.bf16.mxu0 0
    %672 = vmatpush1.bf16.msra.mxu0 %v492
    %673 = vmatprep.subr.bf16.mxu0 0
    %674 = vmatpush1.bf16.msra.mxu0 %v493
    %675 = vmatprep.subr.bf16.mxu0 0
    %676 = vmatpush1.bf16.msra.mxu0 %v494
    %677 = vmatprep.subr.bf16.mxu0 0
    %678 = vmatpush1.bf16.msra.mxu0 %v495
    %679 = vmatprep.subr.bf16.mxu0 0
    %680 = vmatpush1.bf16.msra.mxu0 %v496
    %681 = vmatprep.subr.bf16.mxu0 0
    %682 = vmatpush1.bf16.msra.mxu0 %v497
    %683 = vmatprep.subr.bf16.mxu0 0
    %684 = vmatpush1.bf16.msra.mxu0 %v498
    %685 = vmatprep.subr.bf16.mxu0 0
    %686 = vmatpush1.bf16.msra.mxu0 %v499
    %687 = vmatprep.subr.bf16.mxu0 0
    %688 = vmatpush1.bf16.msra.mxu0 %v500
    %689 = vmatprep.subr.bf16.mxu0 0
    %690 = vmatpush1.bf16.msra.mxu0 %v501
    %691 = vmatprep.subr.bf16.mxu0 0
    %692 = vmatpush1.bf16.msra.mxu0 %v502
    %693 = vmatprep.subr.bf16.mxu0 0
    %694 = vmatpush1.bf16.msra.mxu0 %v503
    %695 = vmatprep.subr.bf16.mxu0 0
    %696 = vmatpush1.bf16.msra.mxu0 %v504
    %697 = vmatprep.subr.bf16.mxu0 0
    %698 = vmatpush1.bf16.msra.mxu0 %v505
    %699 = vmatprep.subr.bf16.mxu0 0
    %700 = vmatpush1.bf16.msra.mxu0 %v506
    %701 = vmatprep.mubr.bf16.mxu0 %v212
    %702 = vmatmul.mubr.bf16.gmra.mrb[0].mxu0 %v211
    %v703 = vpop.f32.mrb[0].mxu0
    %v704 = vadd.f32 %v655, %v703
    %v705 = vpop.f32.mrb[0].mxu0
    %v706 = vpop.f32.mrb[0].mxu0
    %v707 = vadd.f32 %v658, %v706
    %v708 = vpop.f32.mrb[0].mxu0
    %709 = vmatprep.mubr.bf16.mxu0 %v219
    %710 = vmatmul.mubr.bf16.gmra.mrb[0].mxu0 %v218
    %v711 = vpop.f32.mrb[0].mxu0
    %v712 = vadd.f32 %v663, %v711
    %v713 = vpop.f32.mrb[0].mxu0
    %v714 = vpop.f32.mrb[0].mxu0
    %v715 = vadd.f32 %v666, %v714
    %v716 = vpop.f32.mrb[0].mxu0
    %717 = vdwg.mxu0
    %718 = vmatprep.subr.bf16.mxu0 0
    %719 = vmatpush1.bf16.msra.mxu0 %v507
    %720 = vmatprep.subr.bf16.mxu0 0
    %721 = vmatpush1.bf16.msra.mxu0 %v508
    %722 = vmatprep.subr.bf16.mxu0 0
    %723 = vmatpush1.bf16.msra.mxu0 %v509
    %724 = vmatprep.subr.bf16.mxu0 0
    %725 = vmatpush1.bf16.msra.mxu0 %v510
    %726 = vmatprep.subr.bf16.mxu0 0
    %727 = vmatpush1.bf16.msra.mxu0 %v511
    %728 = vmatprep.subr.bf16.mxu0 0
    %729 = vmatpush1.bf16.msra.mxu0 %v512
    %730 = vmatprep.subr.bf16.mxu0 0
    %731 = vmatpush1.bf16.msra.mxu0 %v513
    %732 = vmatprep.subr.bf16.mxu0 0
    %733 = vmatpush1.bf16.msra.mxu0 %v514
    %734 = vmatprep.subr.bf16.mxu0 0
    %735 = vmatpush1.bf16.msra.mxu0 0
    %736 = vmatprep.subr.bf16.mxu0 0
    %737 = vmatpush1.bf16.msra.mxu0 0
    %738 = vmatprep.subr.bf16.mxu0 0
    %739 = vmatpush1.bf16.msra.mxu0 0
    %740 = vmatprep.subr.bf16.mxu0 0
    %741 = vmatpush1.bf16.msra.mxu0 0
    %742 = vmatprep.subr.bf16.mxu0 0
    %743 = vmatpush1.bf16.msra.mxu0 0
    %744 = vmatprep.subr.bf16.mxu0 0
    %745 = vmatpush1.bf16.msra.mxu0 0
    %746 = vmatprep.subr.bf16.mxu0 0
    %747 = vmatpush1.bf16.msra.mxu0 0
    %748 = vmatprep.subr.bf16.mxu0 0
    %749 = vmatpush1.bf16.msra.mxu0 0
    %750 = vmatprep.mubr.bf16.mxu0 0
    %751 = vmatmul.mubr.bf16.gmra.mrb[0].mxu0 %v213
    %v752 = vpop.f32.mrb[0].mxu0
    %v753 = vadd.f32 %v704, %v752
    %v754 = vpop.f32.mrb[0].mxu0
    %v755 = vpop.f32.mrb[0].mxu0
    %v756 = vadd.f32 %v707, %v755
    %v757 = vpop.f32.mrb[0].mxu0
    %758 = vmatprep.mubr.bf16.mxu0 0
    %759 = vmatmul.mubr.bf16.gmra.mrb[0].mxu0 %v220
    %v760 = vpop.f32.mrb[0].mxu0
    %v761 = vadd.f32 %v712, %v760
    %v762 = vpop.f32.mrb[0].mxu0
    %v763 = vpop.f32.mrb[0].mxu0
    %v764 = vadd.f32 %v715, %v763
    %v765 = vpop.f32.mrb[0].mxu0
    %766 = vdwg.mxu0
    %v767 = vround.ne.pseudo %v753
    %v768 = vround.ne.pseudo %v756
    %v769 = vround.ne.pseudo %v761
    %v770 = vround.ne.pseudo %v764
    %v771 = vld [vmem:[%s3] sm:$0x1]
    %v772 = vld [vmem:[%s4] sm:$0x1]
    %v773 = vand.u32 2147483647, %v767
    %v774 = vand.u32 2147483647, %v768
    %v775 = vand.u32 2147483647, %v769
    %v776 = vand.u32 2147483647, %v770
    %v777 = vsub.f32 -0.5, %v773
    %v778 = vsub.f32 -0.5, %v774
    %v779 = vsub.f32 -0.5, %v775
    %v780 = vsub.f32 -0.5, %v776
    %v782 = vlaneseq
    %v783 = vshrl.u32 %v782, 7
    %v784 = vsub.s32 0, %v783
    %v785 = vrot.slane %v771, %v784
    %v787 = vmul.f32 %v777, %v785
    %v788 = vmul.f32 %v778, %v785
    %v789 = vmul.f32 %v779, %v785
    %v790 = vmul.f32 %v780, %v785
    %v791 = vmul.f32 %v787, 1.442695
    %v792 = vpow.pop %v791
    %v793 = vmul.f32 %v788, 1.442695
    %v794 = vpow.pop %v793
    %v795 = vmul.f32 %v789, 1.442695
    %v796 = vpow.pop %v795
    %v797 = vmul.f32 %v790, 1.442695
    %v798 = vpow.pop %v797
    %v800 = vlaneseq
    %v801 = vshrl.u32 %v800, 7
    %v802 = vsub.s32 0, %v801
    %v803 = vrot.slane %v772, %v802
    %v805 = vmul.f32 %v792, %v803
    %v806 = vmul.f32 %v794, %v803
    %v807 = vmul.f32 %v796, %v803
    %v808 = vmul.f32 %v798, %v803
    %v809 = vadd.f32 %v792, %v805
    %v810 = vadd.f32 %v794, %v806
    %v811 = vadd.f32 %v796, %v807
    %v812 = vadd.f32 %v798, %v808
    %v813 = vadd.f32 %v809, 1.0
    %v814 = vadd.f32 %v810, 1.0
    %v815 = vadd.f32 %v811, 1.0
    %v816 = vadd.f32 %v812, 1.0
    %v817 = vadd.f32 %v792, 1.0
    %v818 = vadd.f32 %v794, 1.0
    %v819 = vadd.f32 %v796, 1.0
    %v820 = vadd.f32 %v798, 1.0
    %v821 = vmul.f32 %v813, %v817
    %v822 = vmul.f32 %v814, %v818
    %v823 = vmul.f32 %v815, %v819
    %v824 = vmul.f32 %v816, %v820
    %v825 = vrcp.pop %v821
    %v826 = vmul.f32 %v805, %v825
    %v827 = vrcp.pop %v822
    %v828 = vmul.f32 %v806, %v827
    %v829 = vrcp.pop %v823
    %v830 = vmul.f32 %v807, %v829
    %v831 = vrcp.pop %v824
    %v832 = vmul.f32 %v808, %v831
    %v833 = vmax.f32 %v826, 1e-09
    %v834 = vmax.f32 %v828, 1e-09
    %v835 = vmax.f32 %v830, 1e-09
    %v836 = vmax.f32 %v832, 1e-09
    %837 = vst [vmem:[%s6] sm:$0xff] %v767
    %838 = vst [vmem:[%s6 + $0x8] sm:$0xff] %v768
    %839 = vst [vmem:[%s6 + $0x10] sm:$0xff] %v769
    %840 = vst [vmem:[%s6 + $0x18] sm:$0xff] %v770
    %841 = vst [vmem:[#allocation2] sm:$0xff] %v833
    %842 = vst [vmem:[#allocation2 + $0x8] sm:$0xff] %v834
    %843 = vst [vmem:[#allocation2 + $0x10] sm:$0xff] %v835
    %844 = vst [vmem:[#allocation2 + $0x18] sm:$0xff] %v836
    %v845 = vlog2.pop %v833
    %v846 = vmul.f32 %v845, 0.6931472
    %v847 = vlog2.pop %v834
    %v848 = vmul.f32 %v847, 0.6931472
    %v849 = vlog2.pop %v835
    %v850 = vmul.f32 %v849, 0.6931472
    %v851 = vlog2.pop %v836
    %v852 = vmul.f32 %v851, 0.6931472
    %v853 = vrcp.pop 0.6931472
    %v854 = vmul.f32 %v846, %v853
    %v855 = vmul.f32 %v848, %v853
    %v856 = vmul.f32 %v850, %v853
    %v857 = vmul.f32 %v852, %v853
    %v858 = vsub.f32 0.0, %v854
    %v859 = vsub.f32 0.0, %v855
    %v860 = vsub.f32 0.0, %v856
    %v861 = vsub.f32 0.0, %v857
    %v862 = vld [vmem:[%s5] sm:$0x1]
    %v864 = vlaneseq
    %v865 = vshrl.u32 %v864, 7
    %v866 = vsub.s32 0, %v865
    %v867 = vrot.slane %v862, %v866
    %v869 = vmul.f32 %v858, %v867
    %v870 = vmul.f32 %v859, %v867
    %v871 = vmul.f32 %v860, %v867
    %v872 = vmul.f32 %v861, %v867
    %s873 = smul.u32 0, 32
    %s874 = ssub.s32 32, %s873
    %v875 = vlaneseq
    %v876 = vshrl.u32 %v875, 7
    %v877 = vadd.s32 %v876, 8
    %v878 = vadd.s32 %v876, 16
    %v879 = vadd.s32 %v876, 24
    %v880 = vstv %s874
    %vm881 = vcmp.lt.s32.totalorder %v876, %v880
    %vm882 = vcmp.lt.s32.totalorder %v877, %v880
    %vm883 = vcmp.lt.s32.totalorder %v878, %v880
    %vm884 = vcmp.lt.s32.totalorder %v879, %v880
    %v885 = vsel %vm881, 1, 0
    %v886 = vsel %vm882, 1, 0
    %v887 = vsel %vm883, 1, 0
    %v888 = vsel %vm884, 1, 0
    %vm889 = vcmp.eq.s32.totalorder %v885, 1
    %vm890 = vcmp.eq.s32.totalorder %v886, 1
    %vm891 = vcmp.eq.s32.totalorder %v887, 1
    %vm892 = vcmp.eq.s32.totalorder %v888, 1
    %v893 = vsel %vm889, %v869, 0.0
    %v894 = vsel %vm890, %v870, 0.0
    %v895 = vsel %vm891, %v871, 0.0
    %v896 = vsel %vm892, %v872, 0.0
    %v897 = vadd.f32 %v893, %v894
    %v898 = vadd.f32 %v897, %v895
    %v899 = vadd.f32 %v898, %v896
    %900 = vadd.xlane.f32.xlu0 %v899
    %v901 = vpop.xlane.xlu0 %900
    %v902 = vrot.slane %v901, 4
    %v903 = vadd.f32 %v901, %v902
    %v904 = vrot.slane %v903, 2
    %v905 = vadd.f32 %v903, %v904
    %v906 = vrot.slane %v905, 1
    %v907 = vadd.f32 %v905, %v906
    %s908 = vtos %v907
    %vm909 = vcmp.eq.s32.totalorder %v876, 0
    %v910 = vlaneseq
    %v911 = vand.u32 %v910, 127
    %vm912 = vcmp.eq.s32.totalorder %v911, 0
    %vm913 = vmand %vm909, %vm912
    %v914 = vstv %s908
    %v915 = vsel %vm913, %v914, 0.0
    %916 = vst [vmem:[%s8] sm:$0xff] %v915
    // Predicated region
    $region26: #{a_call__.5} parent=1 // pred_check
      _
    $region27: #{a_call__.5} parent=1 // pred_check_branch
      %918 = sbr.rel (0) target = $region29
    $region28: #{a_call__.5} parent=1 // pred_region
      _
    $region29: #{a_call__.5} parent=1 // pred_fallthru
      _
    // Predicated region
    $region30: #{a_call__.5} parent=1 // pred_check
      _
    $region31: #{a_call__.5} parent=1 // pred_check_branch
      %920 = sbr.rel (0) target = $region33
    $region32: #{a_call__.5} parent=1 // pred_region
      %s922 = ssub.s32 512, 512
      %923 = vsyncadd [#allocation3], %s922
      %s924 = sshll.u32 [#allocation2], 4
      %s925 = int_to_ptr.vmem [resolvable:$true] %s924
      %930 = dma.vmem_to_hbm [thread:$0]  %s925, 512, %s7, [#allocation3], 128, 128, 8
    $region33: #{a_call__.5} parent=1 // pred_fallthru
      _
    // Predicated region
    $region34: #{a_call__.5} parent=1 // pred_check
      _
    $region35: #{a_call__.5} parent=1 // pred_check_branch
      %932 = sbr.rel (0) target = $region37
    $region36: #{a_call__.5} parent=1 // pred_region
      _
    $region37: #{a_call__.5} parent=1 // pred_fallthru
      _
    // Predicated region
    $region38: #{a_call__.5} parent=1 // pred_check
      _
    $region39: #{a_call__.5} parent=1 // pred_check_branch
      %934 = sbr.rel (0) target = $region41
    $region40: #{a_call__.5} parent=1 // pred_region
      _
    $region41: #{a_call__.5} parent=1 // pred_fallthru
      _
    // Predicated region
    $region42: #{a_call__.5} parent=1 // pred_check
      _
    $region43: #{a_call__.5} parent=1 // pred_check_branch
      %936 = sbr.rel (0) target = $region45
    $region44: #{a_call__.5} parent=1 // pred_region
      %937 = dma.done [#allocation3], 512
    $region45: #{a_call__.5} parent=1 // pred_fallthru
      _
    // Predicated region
    $region46: #{a_call__.5} parent=1 // pred_check
      _
    $region47: #{a_call__.5} parent=1 // pred_check_branch
      %939 = sbr.rel (0) target = $region49
    $region48: #{a_call__.5} parent=1 // pred_region
      _
    $region49: #{a_call__.5} parent=1 // pred_fallthru
      _
    %940 = vsyncpa [#allocation3], 1

// kernel: a_call__.6
$region0: #{a_call__.6}
  #allocation0 [shape = 'u32[]', space=smem, size = 0x4, offset = 0x4, fixed_abs, tag = 'smem constant byte address 0x4 - core index']
  #allocation1 [shape = 'u32[144,128]{1,0:T(1,128)}', space=vmem, size = 0x12000, scoped, tag = 'internal scratch']
  %s0 = inlined_call_operand.vmem [shape: bf16[32,512], index: 0, kind: input, shape index: {}]
  %s1 = inlined_call_operand.vmem [shape: bf16[512,128], index: 1, kind: input, shape index: {}]
  %s2 = inlined_call_operand.vmem [shape: f32[1,128], index: 2, kind: input, shape index: {}]
  %s3 = inlined_call_operand.vmem [shape: bf16[32,128], index: 3, kind: output, shape index: {}]
  %s4 = sld [smem:[#allocation0]]
  $region22: #{a_call__.6} parent=0
    _
  %s6 = ssub.s32 1, %s4
  %s7 = scalar_select 0, %s6, %s4
  // Predicated region
  $region2: #{a_call__.6} parent=0 // pred_check
    _
  $region3: #{a_call__.6} parent=0 // pred_check_branch
    %9 = sbr.rel (0) target = $region5
  $region4: #{a_call__.6} parent=0 // pred_region
    _
  $region5: #{a_call__.6} parent=0 // pred_fallthru
    _
  // Predicated region
  $region6: #{a_call__.6} parent=0 // pred_check
    _
  $region7: #{a_call__.6} parent=0 // pred_check_branch
    %11 = sbr.rel (0) target = $region9
  $region8: #{a_call__.6} parent=0 // pred_region
    _
  $region9: #{a_call__.6} parent=0 // pred_fallthru
    _
  // Predicated region
  $region10: #{a_call__.6} parent=0 // pred_check
    _
  $region11: #{a_call__.6} parent=0 // pred_check_branch
    %13 = sbr.rel (0) target = $region13
  $region12: #{a_call__.6} parent=0 // pred_region
    _
  $region13: #{a_call__.6} parent=0 // pred_fallthru
    _
  %v15 = vld [vmem:[%s0] sm:$0xff]
  %v16 = vld [vmem:[%s0 + $0x8] sm:$0xff]
  %v17 = vld [vmem:[%s0 + $0x10] sm:$0xff]
  %v18 = vld [vmem:[%s0 + $0x18] sm:$0xff]
  %v19 = vld [vmem:[%s0 + $0x20] sm:$0xff]
  %v20 = vld [vmem:[%s0 + $0x28] sm:$0xff]
  %v21 = vld [vmem:[%s0 + $0x30] sm:$0xff]
  %v22 = vld [vmem:[%s0 + $0x38] sm:$0xff]
  %v23 = vld [vmem:[%s1] sm:$0xf]
  %v24 = vld [vmem:[%s1 + $0x4] sm:$0xf]
  %v25 = vld [vmem:[%s1 + $0x8] sm:$0xf]
  %v26 = vld [vmem:[%s1 + $0xc] sm:$0xf]
  %v27 = vld [vmem:[%s1 + $0x10] sm:$0xf]
  %v28 = vld [vmem:[%s1 + $0x14] sm:$0xf]
  %v29 = vld [vmem:[%s1 + $0x18] sm:$0xf]
  %v30 = vld [vmem:[%s1 + $0x1c] sm:$0xf]
  %v31 = vld [vmem:[%s1 + $0x20] sm:$0xf]
  %v32 = vld [vmem:[%s1 + $0x24] sm:$0xf]
  %v33 = vld [vmem:[%s1 + $0x28] sm:$0xf]
  %v34 = vld [vmem:[%s1 + $0x2c] sm:$0xf]
  %v35 = vld [vmem:[%s1 + $0x30] sm:$0xf]
  %v36 = vld [vmem:[%s1 + $0x34] sm:$0xf]
  %v37 = vld [vmem:[%s1 + $0x38] sm:$0xf]
  %v38 = vld [vmem:[%s1 + $0x3c] sm:$0xf]
  %v39 = vld [vmem:[%s1 + $0x40] sm:$0xf]
  %v40 = vld [vmem:[%s1 + $0x44] sm:$0xf]
  %v41 = vld [vmem:[%s1 + $0x48] sm:$0xf]
  %v42 = vld [vmem:[%s1 + $0x4c] sm:$0xf]
  %v43 = vld [vmem:[%s1 + $0x50] sm:$0xf]
  %v44 = vld [vmem:[%s1 + $0x54] sm:$0xf]
  %v45 = vld [vmem:[%s1 + $0x58] sm:$0xf]
  %v46 = vld [vmem:[%s1 + $0x5c] sm:$0xf]
  %v47 = vld [vmem:[%s1 + $0x60] sm:$0xf]
  %v48 = vld [vmem:[%s1 + $0x64] sm:$0xf]
  %v49 = vld [vmem:[%s1 + $0x68] sm:$0xf]
  %v50 = vld [vmem:[%s1 + $0x6c] sm:$0xf]
  %v51 = vld [vmem:[%s1 + $0x70] sm:$0xf]
  %v52 = vld [vmem:[%s1 + $0x74] sm:$0xf]
  %v53 = vld [vmem:[%s1 + $0x78] sm:$0xf]
  %v54 = vld [vmem:[%s1 + $0x7c] sm:$0xf]
  %v55 = vld [vmem:[%s1 + $0x80] sm:$0xf]
  %v56 = vld [vmem:[%s1 + $0x84] sm:$0xf]
  %v57 = vld [vmem:[%s1 + $0x88] sm:$0xf]
  %v58 = vld [vmem:[%s1 + $0x8c] sm:$0xf]
  %v59 = vld [vmem:[%s1 + $0x90] sm:$0xf]
  %v60 = vld [vmem:[%s1 + $0x94] sm:$0xf]
  %v61 = vld [vmem:[%s1 + $0x98] sm:$0xf]
  %v62 = vld [vmem:[%s1 + $0x9c] sm:$0xf]
  %v63 = vld [vmem:[%s1 + $0xa0] sm:$0xf]
  %v64 = vld [vmem:[%s1 + $0xa4] sm:$0xf]
  %v65 = vld [vmem:[%s1 + $0xa8] sm:$0xf]
  %v66 = vld [vmem:[%s1 + $0xac] sm:$0xf]
  %v67 = vld [vmem:[%s1 + $0xb0] sm:$0xf]
  %v68 = vld [vmem:[%s1 + $0xb4] sm:$0xf]
  %v69 = vld [vmem:[%s1 + $0xb8] sm:$0xf]
  %v70 = vld [vmem:[%s1 + $0xbc] sm:$0xf]
  %v71 = vld [vmem:[%s1 + $0xc0] sm:$0xf]
  %v72 = vld [vmem:[%s1 + $0xc4] sm:$0xf]
  %v73 = vld [vmem:[%s1 + $0xc8] sm:$0xf]
  %v74 = vld [vmem:[%s1 + $0xcc] sm:$0xf]
  %v75 = vld [vmem:[%s1 + $0xd0] sm:$0xf]
  %v76 = vld [vmem:[%s1 + $0xd4] sm:$0xf]
  %v77 = vld [vmem:[%s1 + $0xd8] sm:$0xf]
  %v78 = vld [vmem:[%s1 + $0xdc] sm:$0xf]
  %v79 = vld [vmem:[%s1 + $0xe0] sm:$0xf]
  %v80 = vld [vmem:[%s1 + $0xe4] sm:$0xf]
  %v81 = vld [vmem:[%s1 + $0xe8] sm:$0xf]
  %v82 = vld [vmem:[%s1 + $0xec] sm:$0xf]
  %v83 = vld [vmem:[%s1 + $0xf0] sm:$0xf]
  %v84 = vld [vmem:[%s1 + $0xf4] sm:$0xf]
  %v85 = vld [vmem:[%s1 + $0xf8] sm:$0xf]
  %v86 = vld [vmem:[%s1 + $0xfc] sm:$0xf]
  %v87 = vld [vmem:[%s2] sm:$0x1]
  %v89 = vlaneseq
  %v90 = vshrl.u32 %v89, 7
  %v91 = vsub.s32 0, %v90
  %v92 = vrot.slane %v87, %v91
  %v102 = vunpack.c.l.b16 %v15
  %v103 = vunpack.c.h.b16 %v15
  %v104 = vunpack.c.l.b16 %v16
  %v105 = vunpack.c.h.b16 %v16
  %v106 = vunpack.c.l.b16 %v17
  %v107 = vunpack.c.h.b16 %v17
  %v108 = vunpack.c.l.b16 %v18
  %v109 = vunpack.c.h.b16 %v18
  %v110 = vunpack.c.l.b16 %v19
  %v111 = vunpack.c.h.b16 %v19
  %v112 = vunpack.c.l.b16 %v20
  %v113 = vunpack.c.h.b16 %v20
  %v114 = vunpack.c.l.b16 %v21
  %v115 = vunpack.c.h.b16 %v21
  %v116 = vunpack.c.l.b16 %v22
  %v117 = vunpack.c.h.b16 %v22
  %v118 = vpack.c.b16 %v106, %v102
  %v119 = vpack.c.b16 %v107, %v103
  %v120 = vpack.c.b16 %v108, %v104
  %v121 = vpack.c.b16 %v109, %v105
  %v122 = vpack.c.b16 %v114, %v110
  %v123 = vpack.c.b16 %v115, %v111
  %v124 = vpack.c.b16 %v116, %v112
  %v125 = vpack.c.b16 %v117, %v113
  %v198 = vunpack.c.l.b16 %v23
  %v199 = vunpack.c.l.b16 %v24
  %v200 = vunpack.c.l.b16 %v25
  %v201 = vunpack.c.l.b16 %v26
  %v202 = vunpack.c.l.b16 %v27
  %v203 = vunpack.c.l.b16 %v28
  %v204 = vunpack.c.l.b16 %v29
  %v205 = vunpack.c.l.b16 %v30
  %v206 = vunpack.c.l.b16 %v31
  %v207 = vunpack.c.l.b16 %v32
  %v208 = vunpack.c.l.b16 %v33
  %v209 = vunpack.c.l.b16 %v34
  %v210 = vunpack.c.l.b16 %v35
  %v211 = vunpack.c.l.b16 %v36
  %v212 = vunpack.c.l.b16 %v37
  %v213 = vunpack.c.l.b16 %v38
  %v214 = vunpack.c.l.b16 %v39
  %v215 = vunpack.c.l.b16 %v40
  %v216 = vunpack.c.l.b16 %v41
  %v217 = vunpack.c.l.b16 %v42
  %v218 = vunpack.c.l.b16 %v43
  %v219 = vunpack.c.l.b16 %v44
  %v220 = vunpack.c.l.b16 %v45
  %v221 = vunpack.c.l.b16 %v46
  %v222 = vunpack.c.l.b16 %v47
  %v223 = vunpack.c.l.b16 %v48
  %v224 = vunpack.c.l.b16 %v49
  %v225 = vunpack.c.l.b16 %v50
  %v226 = vunpack.c.l.b16 %v51
  %v227 = vunpack.c.l.b16 %v52
  %v228 = vunpack.c.l.b16 %v53
  %v229 = vunpack.c.l.b16 %v54
  %v230 = vunpack.c.l.b16 %v55
  %v231 = vunpack.c.l.b16 %v56
  %v232 = vunpack.c.l.b16 %v57
  %v233 = vunpack.c.l.b16 %v58
  %v234 = vunpack.c.l.b16 %v59
  %v235 = vunpack.c.l.b16 %v60
  %v236 = vunpack.c.l.b16 %v61
  %v237 = vunpack.c.l.b16 %v62
  %v238 = vunpack.c.l.b16 %v63
  %v239 = vunpack.c.l.b16 %v64
  %v240 = vunpack.c.l.b16 %v65
  %v241 = vunpack.c.l.b16 %v66
  %v242 = vunpack.c.l.b16 %v67
  %v243 = vunpack.c.l.b16 %v68
  %v244 = vunpack.c.l.b16 %v69
  %v245 = vunpack.c.l.b16 %v70
  %v246 = vunpack.c.l.b16 %v71
  %v247 = vunpack.c.l.b16 %v72
  %v248 = vunpack.c.l.b16 %v73
  %v249 = vunpack.c.l.b16 %v74
  %v250 = vunpack.c.l.b16 %v75
  %v251 = vunpack.c.l.b16 %v76
  %v252 = vunpack.c.l.b16 %v77
  %v253 = vunpack.c.l.b16 %v78
  %v254 = vunpack.c.l.b16 %v79
  %v255 = vunpack.c.l.b16 %v80
  %v256 = vunpack.c.l.b16 %v81
  %v257 = vunpack.c.l.b16 %v82
  %v258 = vunpack.c.l.b16 %v83
  %v259 = vunpack.c.l.b16 %v84
  %v260 = vunpack.c.l.b16 %v85
  %v261 = vunpack.c.l.b16 %v86
  %v262 = vpack.c.b16 %v199, %v198
  %v263 = vpack.c.b16 %v201, %v200
  %v264 = vpack.c.b16 %v203, %v202
  %v265 = vpack.c.b16 %v205, %v204
  %v266 = vpack.c.b16 %v207, %v206
  %v267 = vpack.c.b16 %v209, %v208
  %v268 = vpack.c.b16 %v211, %v210
  %v269 = vpack.c.b16 %v213, %v212
  %v270 = vpack.c.b16 %v215, %v214
  %v271 = vpack.c.b16 %v217, %v216
  %v272 = vpack.c.b16 %v219, %v218
  %v273 = vpack.c.b16 %v221, %v220
  %v274 = vpack.c.b16 %v223, %v222
  %v275 = vpack.c.b16 %v225, %v224
  %v276 = vpack.c.b16 %v227, %v226
  %v277 = vpack.c.b16 %v229, %v228
  %v278 = vpack.c.b16 %v231, %v230
  %v279 = vpack.c.b16 %v233, %v232
  %v280 = vpack.c.b16 %v235, %v234
  %v281 = vpack.c.b16 %v237, %v236
  %v282 = vpack.c.b16 %v239, %v238
  %v283 = vpack.c.b16 %v241, %v240
  %v284 = vpack.c.b16 %v243, %v242
  %v285 = vpack.c.b16 %v245, %v244
  %v286 = vpack.c.b16 %v247, %v246
  %v287 = vpack.c.b16 %v249, %v248
  %v288 = vpack.c.b16 %v251, %v250
  %v289 = vpack.c.b16 %v253, %v252
  %v290 = vpack.c.b16 %v255, %v254
  %v291 = vpack.c.b16 %v257, %v256
  %v292 = vpack.c.b16 %v259, %v258
  %v293 = vpack.c.b16 %v261, %v260
  %326 = vmatprep.subr.bf16.mxu0 0
  %327 = vmatpush1.bf16.msra.mxu0 %v262
  %328 = vmatprep.subr.bf16.mxu0 0
  %329 = vmatpush1.bf16.msra.mxu0 %v263
  %330 = vmatprep.subr.bf16.mxu0 0
  %331 = vmatpush1.bf16.msra.mxu0 %v264
  %332 = vmatprep.subr.bf16.mxu0 0
  %333 = vmatpush1.bf16.msra.mxu0 %v265
  %334 = vmatprep.subr.bf16.mxu0 0
  %335 = vmatpush1.bf16.msra.mxu0 %v266
  %336 = vmatprep.subr.bf16.mxu0 0
  %337 = vmatpush1.bf16.msra.mxu0 %v267
  %338 = vmatprep.subr.bf16.mxu0 0
  %339 = vmatpush1.bf16.msra.mxu0 %v268
  %340 = vmatprep.subr.bf16.mxu0 0
  %341 = vmatpush1.bf16.msra.mxu0 %v269
  %342 = vmatprep.subr.bf16.mxu0 0
  %343 = vmatpush1.bf16.msra.mxu0 %v270
  %344 = vmatprep.subr.bf16.mxu0 0
  %345 = vmatpush1.bf16.msra.mxu0 %v271
  %346 = vmatprep.subr.bf16.mxu0 0
  %347 = vmatpush1.bf16.msra.mxu0 %v272
  %348 = vmatprep.subr.bf16.mxu0 0
  %349 = vmatpush1.bf16.msra.mxu0 %v273
  %350 = vmatprep.subr.bf16.mxu0 0
  %351 = vmatpush1.bf16.msra.mxu0 %v274
  %352 = vmatprep.subr.bf16.mxu0 0
  %353 = vmatpush1.bf16.msra.mxu0 %v275
  %354 = vmatprep.subr.bf16.mxu0 0
  %355 = vmatpush1.bf16.msra.mxu0 %v276
  %356 = vmatprep.subr.bf16.mxu0 0
  %357 = vmatpush1.bf16.msra.mxu0 %v277
  %358 = vmatprep.mubr.bf16.mxu0 %v119
  %359 = vmatmul.mubr.bf16.gmra.mrb[0].mxu0 %v118
  %v360 = vpop.f32.mrb[0].mxu0
  %v361 = vadd.f32 %v92, %v360
  %v362 = vpop.f32.mrb[0].mxu0
  %v363 = vpop.f32.mrb[0].mxu0
  %v364 = vadd.f32 %v92, %v363
  %v365 = vpop.f32.mrb[0].mxu0
  %366 = vmatprep.mubr.bf16.mxu0 %v123
  %367 = vmatmul.mubr.bf16.gmra.mrb[0].mxu0 %v122
  %v368 = vpop.f32.mrb[0].mxu0
  %v369 = vadd.f32 %v92, %v368
  %v370 = vpop.f32.mrb[0].mxu0
  %v371 = vpop.f32.mrb[0].mxu0
  %v372 = vadd.f32 %v92, %v371
  %v373 = vpop.f32.mrb[0].mxu0
  %374 = vdwg.mxu0
  %375 = vmatprep.subr.bf16.mxu0 0
  %376 = vmatpush1.bf16.msra.mxu0 %v278
  %377 = vmatprep.subr.bf16.mxu0 0
  %378 = vmatpush1.bf16.msra.mxu0 %v279
  %379 = vmatprep.subr.bf16.mxu0 0
  %380 = vmatpush1.bf16.msra.mxu0 %v280
  %381 = vmatprep.subr.bf16.mxu0 0
  %382 = vmatpush1.bf16.msra.mxu0 %v281
  %383 = vmatprep.subr.bf16.mxu0 0
  %384 = vmatpush1.bf16.msra.mxu0 %v282
  %385 = vmatprep.subr.bf16.mxu0 0
  %386 = vmatpush1.bf16.msra.mxu0 %v283
  %387 = vmatprep.subr.bf16.mxu0 0
  %388 = vmatpush1.bf16.msra.mxu0 %v284
  %389 = vmatprep.subr.bf16.mxu0 0
  %390 = vmatpush1.bf16.msra.mxu0 %v285
  %391 = vmatprep.subr.bf16.mxu0 0
  %392 = vmatpush1.bf16.msra.mxu0 %v286
  %393 = vmatprep.subr.bf16.mxu0 0
  %394 = vmatpush1.bf16.msra.mxu0 %v287
  %395 = vmatprep.subr.bf16.mxu0 0
  %396 = vmatpush1.bf16.msra.mxu0 %v288
  %397 = vmatprep.subr.bf16.mxu0 0
  %398 = vmatpush1.bf16.msra.mxu0 %v289
  %399 = vmatprep.subr.bf16.mxu0 0
  %400 = vmatpush1.bf16.msra.mxu0 %v290
  %401 = vmatprep.subr.bf16.mxu0 0
  %402 = vmatpush1.bf16.msra.mxu0 %v291
  %403 = vmatprep.subr.bf16.mxu0 0
  %404 = vmatpush1.bf16.msra.mxu0 %v292
  %405 = vmatprep.subr.bf16.mxu0 0
  %406 = vmatpush1.bf16.msra.mxu0 %v293
  %407 = vmatprep.mubr.bf16.mxu0 %v121
  %408 = vmatmul.mubr.bf16.gmra.mrb[0].mxu0 %v120
  %v409 = vpop.f32.mrb[0].mxu0
  %v410 = vadd.f32 %v361, %v409
  %v411 = vpop.f32.mrb[0].mxu0
  %v412 = vpop.f32.mrb[0].mxu0
  %v413 = vadd.f32 %v364, %v412
  %v414 = vpop.f32.mrb[0].mxu0
  %415 = vmatprep.mubr.bf16.mxu0 %v125
  %416 = vmatmul.mubr.bf16.gmra.mrb[0].mxu0 %v124
  %v417 = vpop.f32.mrb[0].mxu0
  %v418 = vadd.f32 %v369, %v417
  %v419 = vpop.f32.mrb[0].mxu0
  %v420 = vpop.f32.mrb[0].mxu0
  %v421 = vadd.f32 %v372, %v420
  %v422 = vpop.f32.mrb[0].mxu0
  %423 = vdwg.mxu0
  %v424 = vmax.f32 %v410, 0.0
  %v425 = vmax.f32 %v413, 0.0
  %v426 = vmax.f32 %v418, 0.0
  %v427 = vmax.f32 %v421, 0.0
  %v428 = vpack.c.bf16 %v425, %v424
  %v429 = vpack.c.bf16 %v427, %v426
  %v432 = vunpack.c.l.b16 %v428
  %v433 = vunpack.c.h.b16 %v428
  %v434 = vunpack.c.l.b16 %v429
  %v435 = vunpack.c.h.b16 %v429
  %v436 = vpack.c.b16 %v432, %v432
  %v437 = vpack.c.b16 %v433, %v433
  %v438 = vpack.c.b16 %v434, %v434
  %v439 = vpack.c.b16 %v435, %v435
  %444 = vst [vmem:[%s3] sm:$0xf] %v436
  %445 = vst [vmem:[%s3 + $0x4] sm:$0xf] %v437
  %446 = vst [vmem:[%s3 + $0x8] sm:$0xf] %v438
  %447 = vst [vmem:[%s3 + $0xc] sm:$0xf] %v439
  // Predicated region
  $region14: #{a_call__.6} parent=0 // pred_check
    _
  $region15: #{a_call__.6} parent=0 // pred_check_branch
    %449 = sbr.rel (0) target = $region17
  $region16: #{a_call__.6} parent=0 // pred_region
    _
  $region17: #{a_call__.6} parent=0 // pred_fallthru
    _
  // Predicated region
  $region18: #{a_call__.6} parent=0 // pred_check
    _
  $region19: #{a_call__.6} parent=0 // pred_check_branch
    %451 = sbr.rel (0) target = $region21
  $region20: #{a_call__.6} parent=0 // pred_region
    _
  $region21: #{a_call__.6} parent=0 // pred_fallthru
    _

// kernel: a_call__.7
$region0: #{a_call__.7}
  #allocation0 [shape = 'u32[]', space=smem, size = 0x4, offset = 0x4, fixed_abs, tag = 'smem constant byte address 0x4 - core index']
  #allocation1 [shape = 'u32[144,128]{1,0:T(1,128)}', space=vmem, size = 0x12000, scoped, tag = 'internal scratch']
  %s0 = inlined_call_operand.vmem [shape: bf16[128,384], index: 0, kind: input, shape index: {}]
  %s1 = inlined_call_operand.vmem [shape: bf16[384,128], index: 1, kind: input, shape index: {}]
  %s2 = inlined_call_operand.vmem [shape: f32[1,128], index: 2, kind: input, shape index: {}]
  %s3 = inlined_call_operand.vmem [shape: f32[128,128], index: 3, kind: output, shape index: {}]
  %s4 = sld [smem:[#allocation0]]
  $region22: #{a_call__.7} parent=0
    _
  %s6 = ssub.s32 1, %s4
  %s7 = scalar_select 0, %s6, %s4
  // Predicated region
  $region2: #{a_call__.7} parent=0 // pred_check
    _
  $region3: #{a_call__.7} parent=0 // pred_check_branch
    %9 = sbr.rel (0) target = $region5
  $region4: #{a_call__.7} parent=0 // pred_region
    _
  $region5: #{a_call__.7} parent=0 // pred_fallthru
    _
  // Predicated region
  $region6: #{a_call__.7} parent=0 // pred_check
    _
  $region7: #{a_call__.7} parent=0 // pred_check_branch
    %11 = sbr.rel (0) target = $region9
  $region8: #{a_call__.7} parent=0 // pred_region
    _
  $region9: #{a_call__.7} parent=0 // pred_fallthru
    _
  // Predicated region
  $region10: #{a_call__.7} parent=0 // pred_check
    _
  $region11: #{a_call__.7} parent=0 // pred_check_branch
    %13 = sbr.rel (0) target = $region13
  $region12: #{a_call__.7} parent=0 // pred_region
    _
  $region13: #{a_call__.7} parent=0 // pred_fallthru
    _
  %v15 = vld [vmem:[%s0] sm:$0xff]
  %v16 = vld [vmem:[%s0 + $0x8] sm:$0xf]
  %v17 = vld [vmem:[%s0 + $0xc] sm:$0xff]
  %v18 = vld [vmem:[%s0 + $0x14] sm:$0xf]
  %v19 = vld [vmem:[%s0 + $0x18] sm:$0xff]
  %v20 = vld [vmem:[%s0 + $0x20] sm:$0xf]
  %v21 = vld [vmem:[%s0 + $0x24] sm:$0xff]
  %v22 = vld [vmem:[%s0 + $0x2c] sm:$0xf]
  %v23 = vld [vmem:[%s0 + $0x30] sm:$0xff]
  %v24 = vld [vmem:[%s0 + $0x38] sm:$0xf]
  %v25 = vld [vmem:[%s0 + $0x3c] sm:$0xff]
  %v26 = vld [vmem:[%s0 + $0x44] sm:$0xf]
  %v27 = vld [vmem:[%s0 + $0x48] sm:$0xff]
  %v28 = vld [vmem:[%s0 + $0x50] sm:$0xf]
  %v29 = vld [vmem:[%s0 + $0x54] sm:$0xff]
  %v30 = vld [vmem:[%s0 + $0x5c] sm:$0xf]
  %v31 = vld [vmem:[%s0 + $0x60] sm:$0xff]
  %v32 = vld [vmem:[%s0 + $0x68] sm:$0xf]
  %v33 = vld [vmem:[%s0 + $0x6c] sm:$0xff]
  %v34 = vld [vmem:[%s0 + $0x74] sm:$0xf]
  %v35 = vld [vmem:[%s0 + $0x78] sm:$0xff]
  %v36 = vld [vmem:[%s0 + $0x80] sm:$0xf]
  %v37 = vld [vmem:[%s0 + $0x84] sm:$0xff]
  %v38 = vld [vmem:[%s0 + $0x8c] sm:$0xf]
  %v39 = vld [vmem:[%s0 + $0x90] sm:$0xff]
  %v40 = vld [vmem:[%s0 + $0x98] sm:$0xf]
  %v41 = vld [vmem:[%s0 + $0x9c] sm:$0xff]
  %v42 = vld [vmem:[%s0 + $0xa4] sm:$0xf]
  %v43 = vld [vmem:[%s0 + $0xa8] sm:$0xff]
  %v44 = vld [vmem:[%s0 + $0xb0] sm:$0xf]
  %v45 = vld [vmem:[%s0 + $0xb4] sm:$0xff]
  %v46 = vld [vmem:[%s0 + $0xbc] sm:$0xf]
  %v47 = vld [vmem:[%s1] sm:$0xf]
  %v48 = vld [vmem:[%s1 + $0x4] sm:$0xf]
  %v49 = vld [vmem:[%s1 + $0x8] sm:$0xf]
  %v50 = vld [vmem:[%s1 + $0xc] sm:$0xf]
  %v51 = vld [vmem:[%s1 + $0x10] sm:$0xf]
  %v52 = vld [vmem:[%s1 + $0x14] sm:$0xf]
  %v53 = vld [vmem:[%s1 + $0x18] sm:$0xf]
  %v54 = vld [vmem:[%s1 + $0x1c] sm:$0xf]
  %v55 = vld [vmem:[%s1 + $0x20] sm:$0xf]
  %v56 = vld [vmem:[%s1 + $0x24] sm:$0xf]
  %v57 = vld [vmem:[%s1 + $0x28] sm:$0xf]
  %v58 = vld [vmem:[%s1 + $0x2c] sm:$0xf]
  %v59 = vld [vmem:[%s1 + $0x30] sm:$0xf]
  %v60 = vld [vmem:[%s1 + $0x34] sm:$0xf]
  %v61 = vld [vmem:[%s1 + $0x38] sm:$0xf]
  %v62 = vld [vmem:[%s1 + $0x3c] sm:$0xf]
  %v63 = vld [vmem:[%s1 + $0x40] sm:$0xf]
  %v64 = vld [vmem:[%s1 + $0x44] sm:$0xf]
  %v65 = vld [vmem:[%s1 + $0x48] sm:$0xf]
  %v66 = vld [vmem:[%s1 + $0x4c] sm:$0xf]
  %v67 = vld [vmem:[%s1 + $0x50] sm:$0xf]
  %v68 = vld [vmem:[%s1 + $0x54] sm:$0xf]
  %v69 = vld [vmem:[%s1 + $0x58] sm:$0xf]
  %v70 = vld [vmem:[%s1 + $0x5c] sm:$0xf]
  %v71 = vld [vmem:[%s1 + $0x60] sm:$0xf]
  %v72 = vld [vmem:[%s1 + $0x64] sm:$0xf]
  %v73 = vld [vmem:[%s1 + $0x68] sm:$0xf]
  %v74 = vld [vmem:[%s1 + $0x6c] sm:$0xf]
  %v75 = vld [vmem:[%s1 + $0x70] sm:$0xf]
  %v76 = vld [vmem:[%s1 + $0x74] sm:$0xf]
  %v77 = vld [vmem:[%s1 + $0x78] sm:$0xf]
  %v78 = vld [vmem:[%s1 + $0x7c] sm:$0xf]
  %v79 = vld [vmem:[%s1 + $0x80] sm:$0xf]
  %v80 = vld [vmem:[%s1 + $0x84] sm:$0xf]
  %v81 = vld [vmem:[%s1 + $0x88] sm:$0xf]
  %v82 = vld [vmem:[%s1 + $0x8c] sm:$0xf]
  %v83 = vld [vmem:[%s1 + $0x90] sm:$0xf]
  %v84 = vld [vmem:[%s1 + $0x94] sm:$0xf]
  %v85 = vld [vmem:[%s1 + $0x98] sm:$0xf]
  %v86 = vld [vmem:[%s1 + $0x9c] sm:$0xf]
  %v87 = vld [vmem:[%s1 + $0xa0] sm:$0xf]
  %v88 = vld [vmem:[%s1 + $0xa4] sm:$0xf]
  %v89 = vld [vmem:[%s1 + $0xa8] sm:$0xf]
  %v90 = vld [vmem:[%s1 + $0xac] sm:$0xf]
  %v91 = vld [vmem:[%s1 + $0xb0] sm:$0xf]
  %v92 = vld [vmem:[%s1 + $0xb4] sm:$0xf]
  %v93 = vld [vmem:[%s1 + $0xb8] sm:$0xf]
  %v94 = vld [vmem:[%s1 + $0xbc] sm:$0xf]
  %v95 = vld [vmem:[%s2] sm:$0x1]
  %v97 = vlaneseq
  %v98 = vshrl.u32 %v97, 7
  %v99 = vsub.s32 0, %v98
  %v100 = vrot.slane %v95, %v99
  %v134 = vunpack.c.l.b16 %v15
  %v135 = vunpack.c.h.b16 %v15
  %v136 = vunpack.c.l.b16 %v16
  %v137 = vunpack.c.l.b16 %v17
  %v138 = vunpack.c.h.b16 %v17
  %v139 = vunpack.c.l.b16 %v18
  %v140 = vunpack.c.l.b16 %v19
  %v141 = vunpack.c.h.b16 %v19
  %v142 = vunpack.c.l.b16 %v20
  %v143 = vunpack.c.l.b16 %v21
  %v144 = vunpack.c.h.b16 %v21
  %v145 = vunpack.c.l.b16 %v22
  %v146 = vunpack.c.l.b16 %v23
  %v147 = vunpack.c.h.b16 %v23
  %v148 = vunpack.c.l.b16 %v24
  %v149 = vunpack.c.l.b16 %v25
  %v150 = vunpack.c.h.b16 %v25
  %v151 = vunpack.c.l.b16 %v26
  %v152 = vunpack.c.l.b16 %v27
  %v153 = vunpack.c.h.b16 %v27
  %v154 = vunpack.c.l.b16 %v28
  %v155 = vunpack.c.l.b16 %v29
  %v156 = vunpack.c.h.b16 %v29
  %v157 = vunpack.c.l.b16 %v30
  %v158 = vunpack.c.l.b16 %v31
  %v159 = vunpack.c.h.b16 %v31
  %v160 = vunpack.c.l.b16 %v32
  %v161 = vunpack.c.l.b16 %v33
  %v162 = vunpack.c.h.b16 %v33
  %v163 = vunpack.c.l.b16 %v34
  %v164 = vunpack.c.l.b16 %v35
  %v165 = vunpack.c.h.b16 %v35
  %v166 = vunpack.c.l.b16 %v36
  %v167 = vunpack.c.l.b16 %v37
  %v168 = vunpack.c.h.b16 %v37
  %v169 = vunpack.c.l.b16 %v38
  %v170 = vunpack.c.l.b16 %v39
  %v171 = vunpack.c.h.b16 %v39
  %v172 = vunpack.c.l.b16 %v40
  %v173 = vunpack.c.l.b16 %v41
  %v174 = vunpack.c.h.b16 %v41
  %v175 = vunpack.c.l.b16 %v42
  %v176 = vunpack.c.l.b16 %v43
  %v177 = vunpack.c.h.b16 %v43
  %v178 = vunpack.c.l.b16 %v44
  %v179 = vunpack.c.l.b16 %v45
  %v180 = vunpack.c.h.b16 %v45
  %v181 = vunpack.c.l.b16 %v46
  %v182 = vpack.c.b16 %v137, %v134
  %v183 = vpack.c.b16 %v138, %v135
  %v184 = vpack.c.b16 %v139, %v136
  %v185 = vpack.c.b16 %v143, %v140
  %v186 = vpack.c.b16 %v144, %v141
  %v187 = vpack.c.b16 %v145, %v142
  %v188 = vpack.c.b16 %v149, %v146
  %v189 = vpack.c.b16 %v150, %v147
  %v190 = vpack.c.b16 %v151, %v148
  %v191 = vpack.c.b16 %v155, %v152
  %v192 = vpack.c.b16 %v156, %v153
  %v193 = vpack.c.b16 %v157, %v154
  %v194 = vpack.c.b16 %v161, %v158
  %v195 = vpack.c.b16 %v162, %v159
  %v196 = vpack.c.b16 %v163, %v160
  %v197 = vpack.c.b16 %v167, %v164
  %v198 = vpack.c.b16 %v168, %v165
  %v199 = vpack.c.b16 %v169, %v166
  %v200 = vpack.c.b16 %v173, %v170
  %v201 = vpack.c.b16 %v174, %v171
  %v202 = vpack.c.b16 %v175, %v172
  %v203 = vpack.c.b16 %v179, %v176
  %v204 = vpack.c.b16 %v180, %v177
  %v205 = vpack.c.b16 %v181, %v178
  %v278 = vunpack.c.l.b16 %v47
  %v279 = vunpack.c.l.b16 %v48
  %v280 = vunpack.c.l.b16 %v49
  %v281 = vunpack.c.l.b16 %v50
  %v282 = vunpack.c.l.b16 %v51
  %v283 = vunpack.c.l.b16 %v52
  %v284 = vunpack.c.l.b16 %v53
  %v285 = vunpack.c.l.b16 %v54
  %v286 = vunpack.c.l.b16 %v55
  %v287 = vunpack.c.l.b16 %v56
  %v288 = vunpack.c.l.b16 %v57
  %v289 = vunpack.c.l.b16 %v58
  %v290 = vunpack.c.l.b16 %v59
  %v291 = vunpack.c.l.b16 %v60
  %v292 = vunpack.c.l.b16 %v61
  %v293 = vunpack.c.l.b16 %v62
  %v294 = vunpack.c.l.b16 %v63
  %v295 = vunpack.c.l.b16 %v64
  %v296 = vunpack.c.l.b16 %v65
  %v297 = vunpack.c.l.b16 %v66
  %v298 = vunpack.c.l.b16 %v67
  %v299 = vunpack.c.l.b16 %v68
  %v300 = vunpack.c.l.b16 %v69
  %v301 = vunpack.c.l.b16 %v70
  %v302 = vunpack.c.l.b16 %v71
  %v303 = vunpack.c.l.b16 %v72
  %v304 = vunpack.c.l.b16 %v73
  %v305 = vunpack.c.l.b16 %v74
  %v306 = vunpack.c.l.b16 %v75
  %v307 = vunpack.c.l.b16 %v76
  %v308 = vunpack.c.l.b16 %v77
  %v309 = vunpack.c.l.b16 %v78
  %v310 = vunpack.c.l.b16 %v79
  %v311 = vunpack.c.l.b16 %v80
  %v312 = vunpack.c.l.b16 %v81
  %v313 = vunpack.c.l.b16 %v82
  %v314 = vunpack.c.l.b16 %v83
  %v315 = vunpack.c.l.b16 %v84
  %v316 = vunpack.c.l.b16 %v85
  %v317 = vunpack.c.l.b16 %v86
  %v318 = vunpack.c.l.b16 %v87
  %v319 = vunpack.c.l.b16 %v88
  %v320 = vunpack.c.l.b16 %v89
  %v321 = vunpack.c.l.b16 %v90
  %v322 = vunpack.c.l.b16 %v91
  %v323 = vunpack.c.l.b16 %v92
  %v324 = vunpack.c.l.b16 %v93
  %v325 = vunpack.c.l.b16 %v94
  %v326 = vpack.c.b16 %v279, %v278
  %v327 = vpack.c.b16 %v281, %v280
  %v328 = vpack.c.b16 %v283, %v282
  %v329 = vpack.c.b16 %v285, %v284
  %v330 = vpack.c.b16 %v287, %v286
  %v331 = vpack.c.b16 %v289, %v288
  %v332 = vpack.c.b16 %v291, %v290
  %v333 = vpack.c.b16 %v293, %v292
  %v334 = vpack.c.b16 %v295, %v294
  %v335 = vpack.c.b16 %v297, %v296
  %v336 = vpack.c.b16 %v299, %v298
  %v337 = vpack.c.b16 %v301, %v300
  %v338 = vpack.c.b16 %v303, %v302
  %v339 = vpack.c.b16 %v305, %v304
  %v340 = vpack.c.b16 %v307, %v306
  %v341 = vpack.c.b16 %v309, %v308
  %v342 = vpack.c.b16 %v311, %v310
  %v343 = vpack.c.b16 %v313, %v312
  %v344 = vpack.c.b16 %v315, %v314
  %v345 = vpack.c.b16 %v317, %v316
  %v346 = vpack.c.b16 %v319, %v318
  %v347 = vpack.c.b16 %v321, %v320
  %v348 = vpack.c.b16 %v323, %v322
  %v349 = vpack.c.b16 %v325, %v324
  %374 = vmatprep.subr.bf16.mxu0 0
  %375 = vmatpush1.bf16.msra.mxu0 %v326
  %376 = vmatprep.subr.bf16.mxu0 0
  %377 = vmatpush1.bf16.msra.mxu0 %v327
  %378 = vmatprep.subr.bf16.mxu0 0
  %379 = vmatpush1.bf16.msra.mxu0 %v328
  %380 = vmatprep.subr.bf16.mxu0 0
  %381 = vmatpush1.bf16.msra.mxu0 %v329
  %382 = vmatprep.subr.bf16.mxu0 0
  %383 = vmatpush1.bf16.msra.mxu0 %v330
  %384 = vmatprep.subr.bf16.mxu0 0
  %385 = vmatpush1.bf16.msra.mxu0 %v331
  %386 = vmatprep.subr.bf16.mxu0 0
  %387 = vmatpush1.bf16.msra.mxu0 %v332
  %388 = vmatprep.subr.bf16.mxu0 0
  %389 = vmatpush1.bf16.msra.mxu0 %v333
  %390 = vmatprep.subr.bf16.mxu0 0
  %391 = vmatpush1.bf16.msra.mxu0 %v334
  %392 = vmatprep.subr.bf16.mxu0 0
  %393 = vmatpush1.bf16.msra.mxu0 %v335
  %394 = vmatprep.subr.bf16.mxu0 0
  %395 = vmatpush1.bf16.msra.mxu0 %v336
  %396 = vmatprep.subr.bf16.mxu0 0
  %397 = vmatpush1.bf16.msra.mxu0 %v337
  %398 = vmatprep.subr.bf16.mxu0 0
  %399 = vmatpush1.bf16.msra.mxu0 %v338
  %400 = vmatprep.subr.bf16.mxu0 0
  %401 = vmatpush1.bf16.msra.mxu0 %v339
  %402 = vmatprep.subr.bf16.mxu0 0
  %403 = vmatpush1.bf16.msra.mxu0 %v340
  %404 = vmatprep.subr.bf16.mxu0 0
  %405 = vmatpush1.bf16.msra.mxu0 %v341
  %406 = vmatprep.mubr.bf16.mxu0 %v183
  %407 = vmatmul.mubr.bf16.gmra.mrb[0].mxu0 %v182
  %v408 = vpop.f32.mrb[0].mxu0
  %v409 = vadd.f32 %v100, %v408
  %v410 = vpop.f32.mrb[0].mxu0
  %v411 = vpop.f32.mrb[0].mxu0
  %v412 = vadd.f32 %v100, %v411
  %v413 = vpop.f32.mrb[0].mxu0
  %414 = vmatprep.mubr.bf16.mxu0 %v186
  %415 = vmatmul.mubr.bf16.gmra.mrb[0].mxu0 %v185
  %v416 = vpop.f32.mrb[0].mxu0
  %v417 = vadd.f32 %v100, %v416
  %v418 = vpop.f32.mrb[0].mxu0
  %v419 = vpop.f32.mrb[0].mxu0
  %v420 = vadd.f32 %v100, %v419
  %v421 = vpop.f32.mrb[0].mxu0
  %422 = vmatprep.mubr.bf16.mxu0 %v189
  %423 = vmatmul.mubr.bf16.gmra.mrb[0].mxu0 %v188
  %v424 = vpop.f32.mrb[0].mxu0
  %v425 = vadd.f32 %v100, %v424
  %v426 = vpop.f32.mrb[0].mxu0
  %v427 = vpop.f32.mrb[0].mxu0
  %v428 = vadd.f32 %v100, %v427
  %v429 = vpop.f32.mrb[0].mxu0
  %430 = vmatprep.mubr.bf16.mxu0 %v192
  %431 = vmatmul.mubr.bf16.gmra.mrb[0].mxu0 %v191
  %v432 = vpop.f32.mrb[0].mxu0
  %v433 = vadd.f32 %v100, %v432
  %v434 = vpop.f32.mrb[0].mxu0
  %v435 = vpop.f32.mrb[0].mxu0
  %v436 = vadd.f32 %v100, %v435
  %v437 = vpop.f32.mrb[0].mxu0
  %438 = vmatprep.mubr.bf16.mxu0 %v195
  %439 = vmatmul.mubr.bf16.gmra.mrb[0].mxu0 %v194
  %v440 = vpop.f32.mrb[0].mxu0
  %v441 = vadd.f32 %v100, %v440
  %v442 = vpop.f32.mrb[0].mxu0
  %v443 = vpop.f32.mrb[0].mxu0
  %v444 = vadd.f32 %v100, %v443
  %v445 = vpop.f32.mrb[0].mxu0
  %446 = vmatprep.mubr.bf16.mxu0 %v198
  %447 = vmatmul.mubr.bf16.gmra.mrb[0].mxu0 %v197
  %v448 = vpop.f32.mrb[0].mxu0
  %v449 = vadd.f32 %v100, %v448
  %v450 = vpop.f32.mrb[0].mxu0
  %v451 = vpop.f32.mrb[0].mxu0
  %v452 = vadd.f32 %v100, %v451
  %v453 = vpop.f32.mrb[0].mxu0
  %454 = vmatprep.mubr.bf16.mxu0 %v201
  %455 = vmatmul.mubr.bf16.gmra.mrb[0].mxu0 %v200
  %v456 = vpop.f32.mrb[0].mxu0
  %v457 = vadd.f32 %v100, %v456
  %v458 = vpop.f32.mrb[0].mxu0
  %v459 = vpop.f32.mrb[0].mxu0
  %v460 = vadd.f32 %v100, %v459
  %v461 = vpop.f32.mrb[0].mxu0
  %462 = vmatprep.mubr.bf16.mxu0 %v204
  %463 = vmatmul.mubr.bf16.gmra.mrb[0].mxu0 %v203
  %v464 = vpop.f32.mrb[0].mxu0
  %v465 = vadd.f32 %v100, %v464
  %v466 = vpop.f32.mrb[0].mxu0
  %v467 = vpop.f32.mrb[0].mxu0
  %v468 = vadd.f32 %v100, %v467
  %v469 = vpop.f32.mrb[0].mxu0
  %470 = vdwg.mxu0
  %471 = vmatprep.subr.bf16.mxu0 0
  %472 = vmatpush1.bf16.msra.mxu0 %v342
  %473 = vmatprep.subr.bf16.mxu0 0
  %474 = vmatpush1.bf16.msra.mxu0 %v343
  %475 = vmatprep.subr.bf16.mxu0 0
  %476 = vmatpush1.bf16.msra.mxu0 %v344
  %477 = vmatprep.subr.bf16.mxu0 0
  %478 = vmatpush1.bf16.msra.mxu0 %v345
  %479 = vmatprep.subr.bf16.mxu0 0
  %480 = vmatpush1.bf16.msra.mxu0 %v346
  %481 = vmatprep.subr.bf16.mxu0 0
  %482 = vmatpush1.bf16.msra.mxu0 %v347
  %483 = vmatprep.subr.bf16.mxu0 0
  %484 = vmatpush1.bf16.msra.mxu0 %v348
  %485 = vmatprep.subr.bf16.mxu0 0
  %486 = vmatpush1.bf16.msra.mxu0 %v349
  %487 = vmatprep.subr.bf16.mxu0 0
  %488 = vmatpush1.bf16.msra.mxu0 0
  %489 = vmatprep.subr.bf16.mxu0 0
  %490 = vmatpush1.bf16.msra.mxu0 0
  %491 = vmatprep.subr.bf16.mxu0 0
  %492 = vmatpush1.bf16.msra.mxu0 0
  %493 = vmatprep.subr.bf16.mxu0 0
  %494 = vmatpush1.bf16.msra.mxu0 0
  %495 = vmatprep.subr.bf16.mxu0 0
  %496 = vmatpush1.bf16.msra.mxu0 0
  %497 = vmatprep.subr.bf16.mxu0 0
  %498 = vmatpush1.bf16.msra.mxu0 0
  %499 = vmatprep.subr.bf16.mxu0 0
  %500 = vmatpush1.bf16.msra.mxu0 0
  %501 = vmatprep.subr.bf16.mxu0 0
  %502 = vmatpush1.bf16.msra.mxu0 0
  %503 = vmatprep.mubr.bf16.mxu0 0
  %504 = vmatmul.mubr.bf16.gmra.mrb[0].mxu0 %v184
  %v505 = vpop.f32.mrb[0].mxu0
  %v506 = vadd.f32 %v409, %v505
  %v507 = vpop.f32.mrb[0].mxu0
  %v508 = vpop.f32.mrb[0].mxu0
  %v509 = vadd.f32 %v412, %v508
  %v510 = vpop.f32.mrb[0].mxu0
  %511 = vmatprep.mubr.bf16.mxu0 0
  %512 = vmatmul.mubr.bf16.gmra.mrb[0].mxu0 %v187
  %v513 = vpop.f32.mrb[0].mxu0
  %v514 = vadd.f32 %v417, %v513
  %v515 = vpop.f32.mrb[0].mxu0
  %v516 = vpop.f32.mrb[0].mxu0
  %v517 = vadd.f32 %v420, %v516
  %v518 = vpop.f32.mrb[0].mxu0
  %519 = vmatprep.mubr.bf16.mxu0 0
  %520 = vmatmul.mubr.bf16.gmra.mrb[0].mxu0 %v190
  %v521 = vpop.f32.mrb[0].mxu0
  %v522 = vadd.f32 %v425, %v521
  %v523 = vpop.f32.mrb[0].mxu0
  %v524 = vpop.f32.mrb[0].mxu0
  %v525 = vadd.f32 %v428, %v524
  %v526 = vpop.f32.mrb[0].mxu0
  %527 = vmatprep.mubr.bf16.mxu0 0
  %528 = vmatmul.mubr.bf16.gmra.mrb[0].mxu0 %v193
  %v529 = vpop.f32.mrb[0].mxu0
  %v530 = vadd.f32 %v433, %v529
  %v531 = vpop.f32.mrb[0].mxu0
  %v532 = vpop.f32.mrb[0].mxu0
  %v533 = vadd.f32 %v436, %v532
  %v534 = vpop.f32.mrb[0].mxu0
  %535 = vmatprep.mubr.bf16.mxu0 0
  %536 = vmatmul.mubr.bf16.gmra.mrb[0].mxu0 %v196
  %v537 = vpop.f32.mrb[0].mxu0
  %v538 = vadd.f32 %v441, %v537
  %v539 = vpop.f32.mrb[0].mxu0
  %v540 = vpop.f32.mrb[0].mxu0
  %v541 = vadd.f32 %v444, %v540
  %v542 = vpop.f32.mrb[0].mxu0
  %543 = vmatprep.mubr.bf16.mxu0 0
  %544 = vmatmul.mubr.bf16.gmra.mrb[0].mxu0 %v199
  %v545 = vpop.f32.mrb[0].mxu0
  %v546 = vadd.f32 %v449, %v545
  %v547 = vpop.f32.mrb[0].mxu0
  %v548 = vpop.f32.mrb[0].mxu0
  %v549 = vadd.f32 %v452, %v548
  %v550 = vpop.f32.mrb[0].mxu0
  %551 = vmatprep.mubr.bf16.mxu0 0
  %552 = vmatmul.mubr.bf16.gmra.mrb[0].mxu0 %v202
  %v553 = vpop.f32.mrb[0].mxu0
  %v554 = vadd.f32 %v457, %v553
  %v555 = vpop.f32.mrb[0].mxu0
  %v556 = vpop.f32.mrb[0].mxu0
  %v557 = vadd.f32 %v460, %v556
  %v558 = vpop.f32.mrb[0].mxu0
  %559 = vmatprep.mubr.bf16.mxu0 0
  %560 = vmatmul.mubr.bf16.gmra.mrb[0].mxu0 %v205
  %v561 = vpop.f32.mrb[0].mxu0
  %v562 = vadd.f32 %v465, %v561
  %v563 = vpop.f32.mrb[0].mxu0
  %v564 = vpop.f32.mrb[0].mxu0
  %v565 = vadd.f32 %v468, %v564
  %v566 = vpop.f32.mrb[0].mxu0
  %567 = vdwg.mxu0
  %568 = vst [vmem:[%s3] sm:$0xff] %v506
  %569 = vst [vmem:[%s3 + $0x8] sm:$0xff] %v509
  %570 = vst [vmem:[%s3 + $0x10] sm:$0xff] %v514
  %571 = vst [vmem:[%s3 + $0x18] sm:$0xff] %v517
  %572 = vst [vmem:[%s3 + $0x20] sm:$0xff] %v522
  %573 = vst [vmem:[%s3 + $0x28] sm:$0xff] %v525
  %574 = vst [vmem:[%s3 + $0x30] sm:$0xff] %v530
  %575 = vst [vmem:[%s3 + $0x38] sm:$0xff] %v533
  %576 = vst [vmem:[%s3 + $0x40] sm:$0xff] %v538
  %577 = vst [vmem:[%s3 + $0x48] sm:$0xff] %v541
  %578 = vst [vmem:[%s3 + $0x50] sm:$0xff] %v546
  %579 = vst [vmem:[%s3 + $0x58] sm:$0xff] %v549
  %580 = vst [vmem:[%s3 + $0x60] sm:$0xff] %v554
  %581 = vst [vmem:[%s3 + $0x68] sm:$0xff] %v557
  %582 = vst [vmem:[%s3 + $0x70] sm:$0xff] %v562
  %583 = vst [vmem:[%s3 + $0x78] sm:$0xff] %v565
  // Predicated region
  $region14: #{a_call__.7} parent=0 // pred_check
    _
  $region15: #{a_call__.7} parent=0 // pred_check_branch
    %585 = sbr.rel (0) target = $region17
  $region16: #{a_call__.7} parent=0 // pred_region
    _
  $region17: #{a_call__.7} parent=0 // pred_fallthru
    _
  // Predicated region
  $region18: #{a_call__.7} parent=0 // pred_check
    _
  $region19: #{a_call__.7} parent=0 // pred_check_branch
    %587 = sbr.rel (0) target = $region21
  $region20: #{a_call__.7} parent=0 // pred_region
    _
  $region21: #{a_call__.7} parent=0 // pred_fallthru
    _

</llo_original>
